<compile_context>
chip_gen: v6e
topology: v6e:2x2x1
jax: 0.10.0
libtpu: 0.0.40
codegen_flags: <defaults>
</compile_context>

<pallas_src>
import math

import numpy as np

import jax
import jax.numpy as jnp
from jax import lax
from jax.experimental import pallas as pl
from jax.experimental.pallas import tpu as pltpu


def _bilstm_kernel(gx_ref, lens_ref, whh_ref, gdir_ref, out_ref, sent_ref):
    """Fused bidirectional LSTM recurrence.

    gx_ref   : (T, B, 8H) f32  precomputed input projections + bias, gate
               columns interleaved as [i_f, i_b, f_f, f_b, g_f, g_b, o_f, o_b]
    lens_ref : (B, 1)   int32  valid length per batch row
    whh_ref  : (2H, 8H) f32    block-diagonal recurrent weights (both dirs)
    gdir_ref : (1, 8H)  int32  0 for forward gate lanes, 1 for backward
    out_ref  : (T, B, 2H) f32  [h_fwd | h_bwd] per (t, b); 0 at padded steps
    sent_ref : (B, 2H)  f32    final hidden state of each direction
    """
    T, B, G = gx_ref.shape
    H = G // 8
    H2 = 2 * H

    # Loop-invariant loads / masks (hoisted out of the recurrence).
    whh = whh_ref[...]                                  # (2H, 8H)
    lens = lens_ref[...]                                # (B, 1)
    is_fwd_gate = gdir_ref[...] == 0                    # (1, 8H)
    half_lane = lax.broadcasted_iota(jnp.int32, (1, H2), 1)
    is_fwd_half = half_lane < H                         # (1, 2H)

    def step(s, carry):
        h, c = carry                                    # (B, 2H) = [fwd | bwd]
        t_f = s
        t_b = T - 1 - s

        # Input-side gates: forward blocks from time t_f, backward blocks from
        # time t_b (pure lane select; the projection itself was hoisted out of
        # the serial loop into one batched MXU matmul).
        gx_t = jnp.where(is_fwd_gate, gx_ref[t_f], gx_ref[t_b])      # (B, 8H)

        # Single fused recurrent matmul for both directions.
        gates = gx_t + jnp.dot(h, whh, preferred_element_type=jnp.float32)

        i = jax.nn.sigmoid(gates[:, 0 * H2:1 * H2])     # [i_f | i_b]
        f = jax.nn.sigmoid(gates[:, 1 * H2:2 * H2])     # [f_f | f_b]
        g = jnp.tanh(gates[:, 2 * H2:3 * H2])           # [g_f | g_b]
        o = jax.nn.sigmoid(gates[:, 3 * H2:4 * H2])     # [o_f | o_b]
        c_new = f * c + i * g
        h_new = o * jnp.tanh(c_new)

        # Per-lane timestep: fwd half advances with t_f, bwd half with t_b.
        t_lane = jnp.where(is_fwd_half, t_f, t_b)                    # (1, 2H)
        valid = lens > t_lane                                        # (B, 2H)
        h = jnp.where(valid, h_new, h)
        c = jnp.where(valid, c_new, c)

        valid_f = lens > t_f                                         # (B, 1)
        valid_b = lens > t_b
        out_ref[t_f, :, 0:H] = jnp.where(valid_f, h_new[:, 0:H], 0.0)
        out_ref[t_b, :, H:H2] = jnp.where(valid_b, h_new[:, H:H2], 0.0)
        return h, c

    zeros = jnp.zeros((B, H2), jnp.float32)
    if T <= 64:
        # Fully unrolled recurrence: straight-line code lets the scheduler
        # interleave the two directions' MXU/EUP chains and makes all ref
        # indices static.
        carry = (zeros, zeros)
        for s in range(T):
            carry = step(s, carry)
        h_fin = carry[0]
    else:
        # Long sequences: rolled loop with partial unroll for LLO visibility.
        h_fin, _ = lax.fori_loop(0, T, step, (zeros, zeros), unroll=8)

    sent_ref[...] = h_fin


def _pack_combined_weights(params, H):
    """Repack per-direction (PyTorch-layout) weights into the fused layout.

    Gate columns are interleaved per gate as [i_f,i_b,f_f,f_b,g_f,g_b,o_f,o_b]
    so each activation slice is a contiguous 2H-wide lane block covering both
    directions; W_hh becomes a (2H, 8H) block-diagonal matrix so one MXU
    matmul serves both recurrences.
    """
    wih_f, wih_b = params["wih_f"], params["wih_b"]     # (D, 4H)
    whh_f, whh_b = params["whh_f"], params["whh_b"]     # (H, 4H)
    b_f, b_b = params["b_f"], params["b_b"]             # (1, 4H)

    def interleave(af, ab):
        parts = []
        for g in range(4):
            parts.append(af[..., g * H:(g + 1) * H])
            parts.append(ab[..., g * H:(g + 1) * H])
        return jnp.concatenate(parts, axis=-1)

    w_ih_comb = interleave(wih_f, wih_b)                # (D, 8H)
    b_comb = interleave(b_f, b_b)                       # (1, 8H)

    zH = jnp.zeros((H, H), whh_f.dtype)
    cols = []
    for g in range(4):
        cols.append(jnp.concatenate([whh_f[:, g * H:(g + 1) * H], zH], axis=0))
        cols.append(jnp.concatenate([zH, whh_b[:, g * H:(g + 1) * H]], axis=0))
    w_hh_comb = jnp.concatenate(cols, axis=1)           # (2H, 8H)
    return w_ih_comb, w_hh_comb, b_comb


def bilstm_forward(params, x, lens):
    """x: (B, T, D), lens: (B,) -> (output (B, T, 2H), sent_emb (B, 2H)).

    Assumes max(lens) == T (same output length as pad_packed_sequence).
    """
    B, T, D = x.shape
    H = params["whh_f"].shape[0]                        # per-direction hidden
    G = 8 * H

    w_ih_comb, w_hh_comb, b_comb = _pack_combined_weights(params, H)

    # Hoisted input projection: one batched MXU matmul over all timesteps,
    # produced directly in time-major layout (no explicit transpose of x).
    # Bias is folded in once here instead of once per recurrent step.
    gx = jnp.einsum('btd,dg->tbg', x.astype(jnp.float32), w_ih_comb) + b_comb

    lens2 = lens.astype(jnp.int32).reshape(B, 1)
    gate_dir = jnp.asarray((np.arange(G) // H) % 2, dtype=jnp.int32).reshape(1, G)

    vmem = pl.BlockSpec(memory_space=pltpu.MemorySpace.VMEM)
    out_tm, sent = pl.pallas_call(
        _bilstm_kernel,
        out_shape=(jax.ShapeDtypeStruct((T, B, 2 * H), jnp.float32),
                   jax.ShapeDtypeStruct((B, 2 * H), jnp.float32)),
        in_specs=[vmem, vmem, vmem, vmem],
        out_specs=(vmem, vmem),
        compiler_params=pltpu.CompilerParams(
            vmem_limit_bytes=32 * 1024 * 1024),
    )(gx, lens2, w_hh_comb, gate_dir)

    # Single fused (T, B, 2H) kernel output -> no per-direction concat; one
    # layout transpose back to the caller's batch-major convention.
    output = jnp.transpose(out_tm, (1, 0, 2))           # (B, T, 2H)
    return output, sent


def init_params(key, input_size, hidden_size):
    """Deterministic init mirroring BiLSTM.init_weights.

    Xavier-normal weights; each 1-D bias has its [H:2H] (forget-gate) slice set
    to 1, so the combined bias_ih + bias_hh forget slice is 2.0 — faithful to
    the PyTorch init, which sets that slice on BOTH bias params.
    """
    H = hidden_size // 2
    ks = jax.random.split(key, 4)

    def xavier(k, shape):
        fan_out, fan_in = shape
        std = math.sqrt(2.0 / (fan_in + fan_out))
        return std * jax.random.normal(k, shape, jnp.float32)

    # PyTorch layout: weight_ih (4H, D), weight_hh (4H, H); gate order i, f, g, o.
    wih_f = xavier(ks[0], (4 * H, input_size))
    whh_f = xavier(ks[1], (4 * H, H))
    wih_b = xavier(ks[2], (4 * H, input_size))
    whh_b = xavier(ks[3], (4 * H, H))

    bias = jnp.zeros((4 * H,), jnp.float32).at[H:2 * H].set(1.0)
    b_comb = (bias + bias).reshape(1, 4 * H)            # bias_ih + bias_hh

    return {
        "wih_f": wih_f.T, "whh_f": whh_f.T, "b_f": b_comb,
        "wih_b": wih_b.T, "whh_b": whh_b.T, "b_b": b_comb,
    }


def bilstm_reference(params, x, lens):
    """Pure-JAX reference (same masked-recurrence / packed-sequence semantics)."""
    B, T, _ = x.shape
    H = params["whh_f"].shape[0]
    lens = lens.astype(jnp.int32)

    def run_dir(wih, whh, b, reverse):
        def step(carry, t):
            h, c = carry
            x_t = x[:, t, :]
            gates = x_t @ wih + h @ whh + b
            i = jax.nn.sigmoid(gates[:, :H])
            f = jax.nn.sigmoid(gates[:, H:2 * H])
            g = jnp.tanh(gates[:, 2 * H:3 * H])
            o = jax.nn.sigmoid(gates[:, 3 * H:])
            c_new = f * c + i * g
            h_new = o * jnp.tanh(c_new)
            mask = (lens > t)[:, None]
            h = jnp.where(mask, h_new, h)
            c = jnp.where(mask, c_new, c)
            return (h, c), jnp.where(mask, h_new, 0.0)

        ts = jnp.arange(T)[::-1] if reverse else jnp.arange(T)
        (h, _), outs = lax.scan(step, (jnp.zeros((B, H)), jnp.zeros((B, H))), ts)
        outs = jnp.transpose(outs, (1, 0, 2))
        if reverse:
            outs = outs[:, ::-1, :]
        return outs, h

    out_f, h_f = run_dir(params["wih_f"], params["whh_f"], params["b_f"], False)
    out_b, h_b = run_dir(params["wih_b"], params["whh_b"], params["b_b"], True)
    return (jnp.concatenate([out_f, out_b], -1),
            jnp.concatenate([h_f, h_b], -1))


if __name__ == "__main__":
    key = jax.random.PRNGKey(0)
    B, T, D, hidden_size = 4, 8, 16, 32                 # per-direction H = 16
    kx, kp = jax.random.split(key)

    x = jax.random.normal(kx, (B, T, D), jnp.float32)
    # max(lens) == T so the padded output length matches pad_packed_sequence.
    lens = jnp.array([8, 5, 3, 8], jnp.int32)

    params = init_params(kp, D, hidden_size)

    out, sent = jax.jit(bilstm_forward)(params, x, lens)
    jax.block_until_ready((out, sent))

    ref_out, ref_sent = bilstm_reference(params, x, lens)
    assert out.shape == (B, T, hidden_size) and sent.shape == (B, hidden_size)
    assert jnp.allclose(out, ref_out, atol=1e-2, rtol=1e-2)
    assert jnp.allclose(sent, ref_sent, atol=1e-2, rtol=1e-2)

    print("KERNEL_OK")
</pallas_src>

<mosaic_0001>
module attributes {stable_mosaic.version = 11 : i64} {
  func.func @_bilstm_kernel(%arg0: memref<8x4x128xf32, #tpu.memory_space<vmem>>, %arg1: memref<4x1xi32, #tpu.memory_space<vmem>>, %arg2: memref<32x128xf32, #tpu.memory_space<vmem>>, %arg3: memref<1x128xi32, #tpu.memory_space<vmem>>, %arg4: memref<8x4x32xf32, #tpu.memory_space<vmem>>, %arg5: memref<4x32xf32, #tpu.memory_space<vmem>>) attributes {dimension_semantics = [], scalar_prefetch = 0 : i64, scratch_operands = 0 : i64, tpu.core_type = #tpu.core_type<tc>} {
    %c0 = arith.constant 0 : index
    %c0_0 = arith.constant 0 : index
    %0 = vector.load %arg2[%c0, %c0_0] : memref<32x128xf32, #tpu.memory_space<vmem>>, vector<32x128xf32>
    %c0_1 = arith.constant 0 : index
    %c0_2 = arith.constant 0 : index
    %1 = vector.load %arg1[%c0_1, %c0_2] : memref<4x1xi32, #tpu.memory_space<vmem>>, vector<4x1xi32>
    %c0_3 = arith.constant 0 : index
    %c0_4 = arith.constant 0 : index
    %2 = vector.load %arg3[%c0_3, %c0_4] : memref<1x128xi32, #tpu.memory_space<vmem>>, vector<1x128xi32>
    %c0_i32 = arith.constant 0 : i32
    %3 = vector.broadcast %c0_i32 : i32 to vector<1x128xi32>
    %4 = arith.cmpi eq, %2, %3 : vector<1x128xi32>
    %5 = tpu.iota {dimensions = array<i32: 1>} : vector<1x32xi32>
    %c16_i32 = arith.constant 16 : i32
    %6 = vector.broadcast %c16_i32 : i32 to vector<1x32xi32>
    %7 = arith.cmpi slt, %5, %6 : vector<1x32xi32>
    %cst = arith.constant 0.000000e+00 : f32
    %8 = vector.broadcast %cst : f32 to vector<4x32xf32>
    %c0_5 = arith.constant 0 : index
    %c0_6 = arith.constant 0 : index
    %c0_7 = arith.constant 0 : index
    %9 = vector.load %arg0[%c0_5, %c0_6, %c0_7] : memref<8x4x128xf32, #tpu.memory_space<vmem>>, vector<1x4x128xf32>
    %10 = vector.shape_cast %9 : vector<1x4x128xf32> to vector<4x128xf32>
    %c7 = arith.constant 7 : index
    %c0_8 = arith.constant 0 : index
    %c0_9 = arith.constant 0 : index
    %11 = vector.load %arg0[%c7, %c0_8, %c0_9] : memref<8x4x128xf32, #tpu.memory_space<vmem>>, vector<1x4x128xf32>
    %12 = vector.shape_cast %11 : vector<1x4x128xf32> to vector<4x128xf32>
    %13 = vector.shape_cast %4 : vector<1x128xi1> to vector<1x128xi1>
    %14 = vector.broadcast %13 : vector<1x128xi1> to vector<4x128xi1>
    %15 = arith.select %14, %10, %12 : vector<4x128xi1>, vector<4x128xf32>
    %cst_10 = arith.constant dense<0.000000e+00> : vector<4x128xf32>
    %16 = tpu.matmul %8, %0, %cst_10 {dimension_numbers = #tpu.dot_dimension_numbers<[1], [0], [0], [1], [0, 0, 1, 1], [], []>} : vector<4x32xf32>, vector<32x128xf32>, vector<4x128xf32> -> vector<4x128xf32>
    %17 = arith.addf %15, %16 : vector<4x128xf32>
    %18 = vector.extract_strided_slice %17 {offsets = [0, 0], sizes = [4, 32], strides = [1, 1]} : vector<4x128xf32> to vector<4x32xf32>
    %19 = arith.negf %18 : vector<4x32xf32>
    %20 = math.exp %19 : vector<4x32xf32>
    %cst_11 = arith.constant 1.000000e+00 : f32
    %21 = vector.broadcast %cst_11 : f32 to vector<4x32xf32>
    %22 = arith.addf %21, %20 : vector<4x32xf32>
    %23 = arith.divf %21, %22 : vector<4x32xf32>
    %24 = vector.extract_strided_slice %17 {offsets = [0, 32], sizes = [4, 32], strides = [1, 1]} : vector<4x128xf32> to vector<4x32xf32>
    %25 = arith.negf %24 : vector<4x32xf32>
    %26 = math.exp %25 : vector<4x32xf32>
    %cst_12 = arith.constant 1.000000e+00 : f32
    %27 = vector.broadcast %cst_12 : f32 to vector<4x32xf32>
    %28 = arith.addf %27, %26 : vector<4x32xf32>
    %29 = arith.divf %27, %28 : vector<4x32xf32>
    %30 = vector.extract_strided_slice %17 {offsets = [0, 64], sizes = [4, 32], strides = [1, 1]} : vector<4x128xf32> to vector<4x32xf32>
    %31 = math.tanh %30 : vector<4x32xf32>
    %32 = vector.extract_strided_slice %17 {offsets = [0, 96], sizes = [4, 32], strides = [1, 1]} : vector<4x128xf32> to vector<4x32xf32>
    %33 = arith.negf %32 : vector<4x32xf32>
    %34 = math.exp %33 : vector<4x32xf32>
    %cst_13 = arith.constant 1.000000e+00 : f32
    %35 = vector.broadcast %cst_13 : f32 to vector<4x32xf32>
    %36 = arith.addf %35, %34 : vector<4x32xf32>
    %37 = arith.divf %35, %36 : vector<4x32xf32>
    %38 = arith.mulf %29, %8 : vector<4x32xf32>
    %39 = arith.mulf %23, %31 : vector<4x32xf32>
    %40 = arith.addf %38, %39 : vector<4x32xf32>
    %41 = math.tanh %40 : vector<4x32xf32>
    %42 = arith.mulf %37, %41 : vector<4x32xf32>
    %c0_i32_14 = arith.constant 0 : i32
    %c7_i32 = arith.constant 7 : i32
    %43 = vector.broadcast %c0_i32_14 : i32 to vector<1x32xi32>
    %44 = vector.broadcast %c7_i32 : i32 to vector<1x32xi32>
    %45 = arith.select %7, %43, %44 : vector<1x32xi1>, vector<1x32xi32>
    %46 = vector.broadcast %1 : vector<4x1xi32> to vector<4x32xi32>
    %47 = vector.broadcast %45 : vector<1x32xi32> to vector<4x32xi32>
    %48 = arith.cmpi sgt, %46, %47 : vector<4x32xi32>
    %49 = arith.select %48, %42, %8 : vector<4x32xi1>, vector<4x32xf32>
    %50 = arith.select %48, %40, %8 : vector<4x32xi1>, vector<4x32xf32>
    %c0_i32_15 = arith.constant 0 : i32
    %51 = vector.broadcast %c0_i32_15 : i32 to vector<4x1xi32>
    %52 = arith.cmpi sgt, %1, %51 : vector<4x1xi32>
    %c7_i32_16 = arith.constant 7 : i32
    %53 = vector.broadcast %c7_i32_16 : i32 to vector<4x1xi32>
    %54 = arith.cmpi sgt, %1, %53 : vector<4x1xi32>
    %55 = vector.extract_strided_slice %42 {offsets = [0, 0], sizes = [4, 16], strides = [1, 1]} : vector<4x32xf32> to vector<4x16xf32>
    %cst_17 = arith.constant 0.000000e+00 : f32
    %56 = vector.shape_cast %52 : vector<4x1xi1> to vector<4x1xi1>
    %57 = vector.broadcast %56 : vector<4x1xi1> to vector<4x16xi1>
    %58 = vector.broadcast %cst_17 : f32 to vector<4x16xf32>
    %59 = arith.select %57, %55, %58 : vector<4x16xi1>, vector<4x16xf32>
    %c0_18 = arith.constant 0 : index
    %c0_19 = arith.constant 0 : index
    %c0_20 = arith.constant 0 : index
    %60 = vector.load %arg4[%c0_18, %c0_19, %c0_20] : memref<8x4x32xf32, #tpu.memory_space<vmem>>, vector<1x4x16xf32>
    %61 = vector.shape_cast %60 : vector<1x4x16xf32> to vector<4x16xf32>
    %62 = vector.shape_cast %59 : vector<4x16xf32> to vector<1x4x16xf32>
    tpu.vector_store %arg4[%c0_18, %c0_19, %c0_20], %62 {strides = array<i32>} : memref<8x4x32xf32, #tpu.memory_space<vmem>>, vector<1x4x16xf32>,
    %63 = vector.extract_strided_slice %42 {offsets = [0, 16], sizes = [4, 16], strides = [1, 1]} : vector<4x32xf32> to vector<4x16xf32>
    %cst_21 = arith.constant 0.000000e+00 : f32
    %64 = vector.shape_cast %54 : vector<4x1xi1> to vector<4x1xi1>
    %65 = vector.broadcast %64 : vector<4x1xi1> to vector<4x16xi1>
    %66 = vector.broadcast %cst_21 : f32 to vector<4x16xf32>
    %67 = arith.select %65, %63, %66 : vector<4x16xi1>, vector<4x16xf32>
    %c7_22 = arith.constant 7 : index
    %c0_23 = arith.constant 0 : index
    %c16 = arith.constant 16 : index
    %68 = vector.load %arg4[%c7_22, %c0_23, %c16] : memref<8x4x32xf32, #tpu.memory_space<vmem>>, vector<1x4x16xf32>
    %69 = vector.shape_cast %68 : vector<1x4x16xf32> to vector<4x16xf32>
    %70 = vector.shape_cast %67 : vector<4x16xf32> to vector<1x4x16xf32>
    tpu.vector_store %arg4[%c7_22, %c0_23, %c16], %70 {strides = array<i32>} : memref<8x4x32xf32, #tpu.memory_space<vmem>>, vector<1x4x16xf32>,
    %c1 = arith.constant 1 : index
    %c0_24 = arith.constant 0 : index
    %c0_25 = arith.constant 0 : index
    %71 = vector.load %arg0[%c1, %c0_24, %c0_25] : memref<8x4x128xf32, #tpu.memory_space<vmem>>, vector<1x4x128xf32>
    %72 = vector.shape_cast %71 : vector<1x4x128xf32> to vector<4x128xf32>
    %c6 = arith.constant 6 : index
    %c0_26 = arith.constant 0 : index
    %c0_27 = arith.constant 0 : index
    %73 = vector.load %arg0[%c6, %c0_26, %c0_27] : memref<8x4x128xf32, #tpu.memory_space<vmem>>, vector<1x4x128xf32>
    %74 = vector.shape_cast %73 : vector<1x4x128xf32> to vector<4x128xf32>
    %75 = vector.shape_cast %4 : vector<1x128xi1> to vector<1x128xi1>
    %76 = vector.broadcast %75 : vector<1x128xi1> to vector<4x128xi1>
    %77 = arith.select %76, %72, %74 : vector<4x128xi1>, vector<4x128xf32>
    %cst_28 = arith.constant dense<0.000000e+00> : vector<4x128xf32>
    %78 = tpu.matmul %49, %0, %cst_28 {dimension_numbers = #tpu.dot_dimension_numbers<[1], [0], [0], [1], [0, 0, 1, 1], [], []>} : vector<4x32xf32>, vector<32x128xf32>, vector<4x128xf32> -> vector<4x128xf32>
    %79 = arith.addf %77, %78 : vector<4x128xf32>
    %80 = vector.extract_strided_slice %79 {offsets = [0, 0], sizes = [4, 32], strides = [1, 1]} : vector<4x128xf32> to vector<4x32xf32>
    %81 = arith.negf %80 : vector<4x32xf32>
    %82 = math.exp %81 : vector<4x32xf32>
    %cst_29 = arith.constant 1.000000e+00 : f32
    %83 = vector.broadcast %cst_29 : f32 to vector<4x32xf32>
    %84 = arith.addf %83, %82 : vector<4x32xf32>
    %85 = arith.divf %83, %84 : vector<4x32xf32>
    %86 = vector.extract_strided_slice %79 {offsets = [0, 32], sizes = [4, 32], strides = [1, 1]} : vector<4x128xf32> to vector<4x32xf32>
    %87 = arith.negf %86 : vector<4x32xf32>
    %88 = math.exp %87 : vector<4x32xf32>
    %cst_30 = arith.constant 1.000000e+00 : f32
    %89 = vector.broadcast %cst_30 : f32 to vector<4x32xf32>
    %90 = arith.addf %89, %88 : vector<4x32xf32>
    %91 = arith.divf %89, %90 : vector<4x32xf32>
    %92 = vector.extract_strided_slice %79 {offsets = [0, 64], sizes = [4, 32], strides = [1, 1]} : vector<4x128xf32> to vector<4x32xf32>
    %93 = math.tanh %92 : vector<4x32xf32>
    %94 = vector.extract_strided_slice %79 {offsets = [0, 96], sizes = [4, 32], strides = [1, 1]} : vector<4x128xf32> to vector<4x32xf32>
    %95 = arith.negf %94 : vector<4x32xf32>
    %96 = math.exp %95 : vector<4x32xf32>
    %cst_31 = arith.constant 1.000000e+00 : f32
    %97 = vector.broadcast %cst_31 : f32 to vector<4x32xf32>
    %98 = arith.addf %97, %96 : vector<4x32xf32>
    %99 = arith.divf %97, %98 : vector<4x32xf32>
    %100 = arith.mulf %91, %50 : vector<4x32xf32>
    %101 = arith.mulf %85, %93 : vector<4x32xf32>
    %102 = arith.addf %100, %101 : vector<4x32xf32>
    %103 = math.tanh %102 : vector<4x32xf32>
    %104 = arith.mulf %99, %103 : vector<4x32xf32>
    %c1_i32 = arith.constant 1 : i32
    %c6_i32 = arith.constant 6 : i32
    %105 = vector.broadcast %c1_i32 : i32 to vector<1x32xi32>
    %106 = vector.broadcast %c6_i32 : i32 to vector<1x32xi32>
    %107 = arith.select %7, %105, %106 : vector<1x32xi1>, vector<1x32xi32>
    %108 = vector.broadcast %1 : vector<4x1xi32> to vector<4x32xi32>
    %109 = vector.broadcast %107 : vector<1x32xi32> to vector<4x32xi32>
    %110 = arith.cmpi sgt, %108, %109 : vector<4x32xi32>
    %111 = arith.select %110, %104, %49 : vector<4x32xi1>, vector<4x32xf32>
    %112 = arith.select %110, %102, %50 : vector<4x32xi1>, vector<4x32xf32>
    %c1_i32_32 = arith.constant 1 : i32
    %113 = vector.broadcast %c1_i32_32 : i32 to vector<4x1xi32>
    %114 = arith.cmpi sgt, %1, %113 : vector<4x1xi32>
    %c6_i32_33 = arith.constant 6 : i32
    %115 = vector.broadcast %c6_i32_33 : i32 to vector<4x1xi32>
    %116 = arith.cmpi sgt, %1, %115 : vector<4x1xi32>
    %117 = vector.extract_strided_slice %104 {offsets = [0, 0], sizes = [4, 16], strides = [1, 1]} : vector<4x32xf32> to vector<4x16xf32>
    %cst_34 = arith.constant 0.000000e+00 : f32
    %118 = vector.shape_cast %114 : vector<4x1xi1> to vector<4x1xi1>
    %119 = vector.broadcast %118 : vector<4x1xi1> to vector<4x16xi1>
    %120 = vector.broadcast %cst_34 : f32 to vector<4x16xf32>
    %121 = arith.select %119, %117, %120 : vector<4x16xi1>, vector<4x16xf32>
    %c1_35 = arith.constant 1 : index
    %c0_36 = arith.constant 0 : index
    %c0_37 = arith.constant 0 : index
    %122 = vector.load %arg4[%c1_35, %c0_36, %c0_37] : memref<8x4x32xf32, #tpu.memory_space<vmem>>, vector<1x4x16xf32>
    %123 = vector.shape_cast %122 : vector<1x4x16xf32> to vector<4x16xf32>
    %124 = vector.shape_cast %121 : vector<4x16xf32> to vector<1x4x16xf32>
    tpu.vector_store %arg4[%c1_35, %c0_36, %c0_37], %124 {strides = array<i32>} : memref<8x4x32xf32, #tpu.memory_space<vmem>>, vector<1x4x16xf32>,
    %125 = vector.extract_strided_slice %104 {offsets = [0, 16], sizes = [4, 16], strides = [1, 1]} : vector<4x32xf32> to vector<4x16xf32>
    %cst_38 = arith.constant 0.000000e+00 : f32
    %126 = vector.shape_cast %116 : vector<4x1xi1> to vector<4x1xi1>
    %127 = vector.broadcast %126 : vector<4x1xi1> to vector<4x16xi1>
    %128 = vector.broadcast %cst_38 : f32 to vector<4x16xf32>
    %129 = arith.select %127, %125, %128 : vector<4x16xi1>, vector<4x16xf32>
    %c6_39 = arith.constant 6 : index
    %c0_40 = arith.constant 0 : index
    %c16_41 = arith.constant 16 : index
    %130 = vector.load %arg4[%c6_39, %c0_40, %c16_41] : memref<8x4x32xf32, #tpu.memory_space<vmem>>, vector<1x4x16xf32>
    %131 = vector.shape_cast %130 : vector<1x4x16xf32> to vector<4x16xf32>
    %132 = vector.shape_cast %129 : vector<4x16xf32> to vector<1x4x16xf32>
    tpu.vector_store %arg4[%c6_39, %c0_40, %c16_41], %132 {strides = array<i32>} : memref<8x4x32xf32, #tpu.memory_space<vmem>>, vector<1x4x16xf32>,
    %c2 = arith.constant 2 : index
    %c0_42 = arith.constant 0 : index
    %c0_43 = arith.constant 0 : index
    %133 = vector.load %arg0[%c2, %c0_42, %c0_43] : memref<8x4x128xf32, #tpu.memory_space<vmem>>, vector<1x4x128xf32>
    %134 = vector.shape_cast %133 : vector<1x4x128xf32> to vector<4x128xf32>
    %c5 = arith.constant 5 : index
    %c0_44 = arith.constant 0 : index
    %c0_45 = arith.constant 0 : index
    %135 = vector.load %arg0[%c5, %c0_44, %c0_45] : memref<8x4x128xf32, #tpu.memory_space<vmem>>, vector<1x4x128xf32>
    %136 = vector.shape_cast %135 : vector<1x4x128xf32> to vector<4x128xf32>
    %137 = vector.shape_cast %4 : vector<1x128xi1> to vector<1x128xi1>
    %138 = vector.broadcast %137 : vector<1x128xi1> to vector<4x128xi1>
    %139 = arith.select %138, %134, %136 : vector<4x128xi1>, vector<4x128xf32>
    %cst_46 = arith.constant dense<0.000000e+00> : vector<4x128xf32>
    %140 = tpu.matmul %111, %0, %cst_46 {dimension_numbers = #tpu.dot_dimension_numbers<[1], [0], [0], [1], [0, 0, 1, 1], [], []>} : vector<4x32xf32>, vector<32x128xf32>, vector<4x128xf32> -> vector<4x128xf32>
    %141 = arith.addf %139, %140 : vector<4x128xf32>
    %142 = vector.extract_strided_slice %141 {offsets = [0, 0], sizes = [4, 32], strides = [1, 1]} : vector<4x128xf32> to vector<4x32xf32>
    %143 = arith.negf %142 : vector<4x32xf32>
    %144 = math.exp %143 : vector<4x32xf32>
    %cst_47 = arith.constant 1.000000e+00 : f32
    %145 = vector.broadcast %cst_47 : f32 to vector<4x32xf32>
    %146 = arith.addf %145, %144 : vector<4x32xf32>
    %147 = arith.divf %145, %146 : vector<4x32xf32>
    %148 = vector.extract_strided_slice %141 {offsets = [0, 32], sizes = [4, 32], strides = [1, 1]} : vector<4x128xf32> to vector<4x32xf32>
    %149 = arith.negf %148 : vector<4x32xf32>
    %150 = math.exp %149 : vector<4x32xf32>
    %cst_48 = arith.constant 1.000000e+00 : f32
    %151 = vector.broadcast %cst_48 : f32 to vector<4x32xf32>
    %152 = arith.addf %151, %150 : vector<4x32xf32>
    %153 = arith.divf %151, %152 : vector<4x32xf32>
    %154 = vector.extract_strided_slice %141 {offsets = [0, 64], sizes = [4, 32], strides = [1, 1]} : vector<4x128xf32> to vector<4x32xf32>
    %155 = math.tanh %154 : vector<4x32xf32>
    %156 = vector.extract_strided_slice %141 {offsets = [0, 96], sizes = [4, 32], strides = [1, 1]} : vector<4x128xf32> to vector<4x32xf32>
    %157 = arith.negf %156 : vector<4x32xf32>
    %158 = math.exp %157 : vector<4x32xf32>
    %cst_49 = arith.constant 1.000000e+00 : f32
    %159 = vector.broadcast %cst_49 : f32 to vector<4x32xf32>
    %160 = arith.addf %159, %158 : vector<4x32xf32>
    %161 = arith.divf %159, %160 : vector<4x32xf32>
    %162 = arith.mulf %153, %112 : vector<4x32xf32>
    %163 = arith.mulf %147, %155 : vector<4x32xf32>
    %164 = arith.addf %162, %163 : vector<4x32xf32>
    %165 = math.tanh %164 : vector<4x32xf32>
    %166 = arith.mulf %161, %165 : vector<4x32xf32>
    %c2_i32 = arith.constant 2 : i32
    %c5_i32 = arith.constant 5 : i32
    %167 = vector.broadcast %c2_i32 : i32 to vector<1x32xi32>
    %168 = vector.broadcast %c5_i32 : i32 to vector<1x32xi32>
    %169 = arith.select %7, %167, %168 : vector<1x32xi1>, vector<1x32xi32>
    %170 = vector.broadcast %1 : vector<4x1xi32> to vector<4x32xi32>
    %171 = vector.broadcast %169 : vector<1x32xi32> to vector<4x32xi32>
    %172 = arith.cmpi sgt, %170, %171 : vector<4x32xi32>
    %173 = arith.select %172, %166, %111 : vector<4x32xi1>, vector<4x32xf32>
    %174 = arith.select %172, %164, %112 : vector<4x32xi1>, vector<4x32xf32>
    %c2_i32_50 = arith.constant 2 : i32
    %175 = vector.broadcast %c2_i32_50 : i32 to vector<4x1xi32>
    %176 = arith.cmpi sgt, %1, %175 : vector<4x1xi32>
    %c5_i32_51 = arith.constant 5 : i32
    %177 = vector.broadcast %c5_i32_51 : i32 to vector<4x1xi32>
    %178 = arith.cmpi sgt, %1, %177 : vector<4x1xi32>
    %179 = vector.extract_strided_slice %166 {offsets = [0, 0], sizes = [4, 16], strides = [1, 1]} : vector<4x32xf32> to vector<4x16xf32>
    %cst_52 = arith.constant 0.000000e+00 : f32
    %180 = vector.shape_cast %176 : vector<4x1xi1> to vector<4x1xi1>
    %181 = vector.broadcast %180 : vector<4x1xi1> to vector<4x16xi1>
    %182 = vector.broadcast %cst_52 : f32 to vector<4x16xf32>
    %183 = arith.select %181, %179, %182 : vector<4x16xi1>, vector<4x16xf32>
    %c2_53 = arith.constant 2 : index
    %c0_54 = arith.constant 0 : index
    %c0_55 = arith.constant 0 : index
    %184 = vector.load %arg4[%c2_53, %c0_54, %c0_55] : memref<8x4x32xf32, #tpu.memory_space<vmem>>, vector<1x4x16xf32>
    %185 = vector.shape_cast %184 : vector<1x4x16xf32> to vector<4x16xf32>
    %186 = vector.shape_cast %183 : vector<4x16xf32> to vector<1x4x16xf32>
    tpu.vector_store %arg4[%c2_53, %c0_54, %c0_55], %186 {strides = array<i32>} : memref<8x4x32xf32, #tpu.memory_space<vmem>>, vector<1x4x16xf32>,
    %187 = vector.extract_strided_slice %166 {offsets = [0, 16], sizes = [4, 16], strides = [1, 1]} : vector<4x32xf32> to vector<4x16xf32>
    %cst_56 = arith.constant 0.000000e+00 : f32
    %188 = vector.shape_cast %178 : vector<4x1xi1> to vector<4x1xi1>
    %189 = vector.broadcast %188 : vector<4x1xi1> to vector<4x16xi1>
    %190 = vector.broadcast %cst_56 : f32 to vector<4x16xf32>
    %191 = arith.select %189, %187, %190 : vector<4x16xi1>, vector<4x16xf32>
    %c5_57 = arith.constant 5 : index
    %c0_58 = arith.constant 0 : index
    %c16_59 = arith.constant 16 : index
    %192 = vector.load %arg4[%c5_57, %c0_58, %c16_59] : memref<8x4x32xf32, #tpu.memory_space<vmem>>, vector<1x4x16xf32>
    %193 = vector.shape_cast %192 : vector<1x4x16xf32> to vector<4x16xf32>
    %194 = vector.shape_cast %191 : vector<4x16xf32> to vector<1x4x16xf32>
    tpu.vector_store %arg4[%c5_57, %c0_58, %c16_59], %194 {strides = array<i32>} : memref<8x4x32xf32, #tpu.memory_space<vmem>>, vector<1x4x16xf32>,
    %c3 = arith.constant 3 : index
    %c0_60 = arith.constant 0 : index
    %c0_61 = arith.constant 0 : index
    %195 = vector.load %arg0[%c3, %c0_60, %c0_61] : memref<8x4x128xf32, #tpu.memory_space<vmem>>, vector<1x4x128xf32>
    %196 = vector.shape_cast %195 : vector<1x4x128xf32> to vector<4x128xf32>
    %c4 = arith.constant 4 : index
    %c0_62 = arith.constant 0 : index
    %c0_63 = arith.constant 0 : index
    %197 = vector.load %arg0[%c4, %c0_62, %c0_63] : memref<8x4x128xf32, #tpu.memory_space<vmem>>, vector<1x4x128xf32>
    %198 = vector.shape_cast %197 : vector<1x4x128xf32> to vector<4x128xf32>
    %199 = vector.shape_cast %4 : vector<1x128xi1> to vector<1x128xi1>
    %200 = vector.broadcast %199 : vector<1x128xi1> to vector<4x128xi1>
    %201 = arith.select %200, %196, %198 : vector<4x128xi1>, vector<4x128xf32>
    %cst_64 = arith.constant dense<0.000000e+00> : vector<4x128xf32>
    %202 = tpu.matmul %173, %0, %cst_64 {dimension_numbers = #tpu.dot_dimension_numbers<[1], [0], [0], [1], [0, 0, 1, 1], [], []>} : vector<4x32xf32>, vector<32x128xf32>, vector<4x128xf32> -> vector<4x128xf32>
    %203 = arith.addf %201, %202 : vector<4x128xf32>
    %204 = vector.extract_strided_slice %203 {offsets = [0, 0], sizes = [4, 32], strides = [1, 1]} : vector<4x128xf32> to vector<4x32xf32>
    %205 = arith.negf %204 : vector<4x32xf32>
    %206 = math.exp %205 : vector<4x32xf32>
    %cst_65 = arith.constant 1.000000e+00 : f32
    %207 = vector.broadcast %cst_65 : f32 to vector<4x32xf32>
    %208 = arith.addf %207, %206 : vector<4x32xf32>
    %209 = arith.divf %207, %208 : vector<4x32xf32>
    %210 = vector.extract_strided_slice %203 {offsets = [0, 32], sizes = [4, 32], strides = [1, 1]} : vector<4x128xf32> to vector<4x32xf32>
    %211 = arith.negf %210 : vector<4x32xf32>
    %212 = math.exp %211 : vector<4x32xf32>
    %cst_66 = arith.constant 1.000000e+00 : f32
    %213 = vector.broadcast %cst_66 : f32 to vector<4x32xf32>
    %214 = arith.addf %213, %212 : vector<4x32xf32>
    %215 = arith.divf %213, %214 : vector<4x32xf32>
    %216 = vector.extract_strided_slice %203 {offsets = [0, 64], sizes = [4, 32], strides = [1, 1]} : vector<4x128xf32> to vector<4x32xf32>
    %217 = math.tanh %216 : vector<4x32xf32>
    %218 = vector.extract_strided_slice %203 {offsets = [0, 96], sizes = [4, 32], strides = [1, 1]} : vector<4x128xf32> to vector<4x32xf32>
    %219 = arith.negf %218 : vector<4x32xf32>
    %220 = math.exp %219 : vector<4x32xf32>
    %cst_67 = arith.constant 1.000000e+00 : f32
    %221 = vector.broadcast %cst_67 : f32 to vector<4x32xf32>
    %222 = arith.addf %221, %220 : vector<4x32xf32>
    %223 = arith.divf %221, %222 : vector<4x32xf32>
    %224 = arith.mulf %215, %174 : vector<4x32xf32>
    %225 = arith.mulf %209, %217 : vector<4x32xf32>
    %226 = arith.addf %224, %225 : vector<4x32xf32>
    %227 = math.tanh %226 : vector<4x32xf32>
    %228 = arith.mulf %223, %227 : vector<4x32xf32>
    %c3_i32 = arith.constant 3 : i32
    %c4_i32 = arith.constant 4 : i32
    %229 = vector.broadcast %c3_i32 : i32 to vector<1x32xi32>
    %230 = vector.broadcast %c4_i32 : i32 to vector<1x32xi32>
    %231 = arith.select %7, %229, %230 : vector<1x32xi1>, vector<1x32xi32>
    %232 = vector.broadcast %1 : vector<4x1xi32> to vector<4x32xi32>
    %233 = vector.broadcast %231 : vector<1x32xi32> to vector<4x32xi32>
    %234 = arith.cmpi sgt, %232, %233 : vector<4x32xi32>
    %235 = arith.select %234, %228, %173 : vector<4x32xi1>, vector<4x32xf32>
    %236 = arith.select %234, %226, %174 : vector<4x32xi1>, vector<4x32xf32>
    %c3_i32_68 = arith.constant 3 : i32
    %237 = vector.broadcast %c3_i32_68 : i32 to vector<4x1xi32>
    %238 = arith.cmpi sgt, %1, %237 : vector<4x1xi32>
    %c4_i32_69 = arith.constant 4 : i32
    %239 = vector.broadcast %c4_i32_69 : i32 to vector<4x1xi32>
    %240 = arith.cmpi sgt, %1, %239 : vector<4x1xi32>
    %241 = vector.extract_strided_slice %228 {offsets = [0, 0], sizes = [4, 16], strides = [1, 1]} : vector<4x32xf32> to vector<4x16xf32>
    %cst_70 = arith.constant 0.000000e+00 : f32
    %242 = vector.shape_cast %238 : vector<4x1xi1> to vector<4x1xi1>
    %243 = vector.broadcast %242 : vector<4x1xi1> to vector<4x16xi1>
    %244 = vector.broadcast %cst_70 : f32 to vector<4x16xf32>
    %245 = arith.select %243, %241, %244 : vector<4x16xi1>, vector<4x16xf32>
    %c3_71 = arith.constant 3 : index
    %c0_72 = arith.constant 0 : index
    %c0_73 = arith.constant 0 : index
    %246 = vector.load %arg4[%c3_71, %c0_72, %c0_73] : memref<8x4x32xf32, #tpu.memory_space<vmem>>, vector<1x4x16xf32>
    %247 = vector.shape_cast %246 : vector<1x4x16xf32> to vector<4x16xf32>
    %248 = vector.shape_cast %245 : vector<4x16xf32> to vector<1x4x16xf32>
    tpu.vector_store %arg4[%c3_71, %c0_72, %c0_73], %248 {strides = array<i32>} : memref<8x4x32xf32, #tpu.memory_space<vmem>>, vector<1x4x16xf32>,
    %249 = vector.extract_strided_slice %228 {offsets = [0, 16], sizes = [4, 16], strides = [1, 1]} : vector<4x32xf32> to vector<4x16xf32>
    %cst_74 = arith.constant 0.000000e+00 : f32
    %250 = vector.shape_cast %240 : vector<4x1xi1> to vector<4x1xi1>
    %251 = vector.broadcast %250 : vector<4x1xi1> to vector<4x16xi1>
    %252 = vector.broadcast %cst_74 : f32 to vector<4x16xf32>
    %253 = arith.select %251, %249, %252 : vector<4x16xi1>, vector<4x16xf32>
    %c4_75 = arith.constant 4 : index
    %c0_76 = arith.constant 0 : index
    %c16_77 = arith.constant 16 : index
    %254 = vector.load %arg4[%c4_75, %c0_76, %c16_77] : memref<8x4x32xf32, #tpu.memory_space<vmem>>, vector<1x4x16xf32>
    %255 = vector.shape_cast %254 : vector<1x4x16xf32> to vector<4x16xf32>
    %256 = vector.shape_cast %253 : vector<4x16xf32> to vector<1x4x16xf32>
    tpu.vector_store %arg4[%c4_75, %c0_76, %c16_77], %256 {strides = array<i32>} : memref<8x4x32xf32, #tpu.memory_space<vmem>>, vector<1x4x16xf32>,
    %c4_78 = arith.constant 4 : index
    %c0_79 = arith.constant 0 : index
    %c0_80 = arith.constant 0 : index
    %257 = vector.load %arg0[%c4_78, %c0_79, %c0_80] : memref<8x4x128xf32, #tpu.memory_space<vmem>>, vector<1x4x128xf32>
    %258 = vector.shape_cast %257 : vector<1x4x128xf32> to vector<4x128xf32>
    %c3_81 = arith.constant 3 : index
    %c0_82 = arith.constant 0 : index
    %c0_83 = arith.constant 0 : index
    %259 = vector.load %arg0[%c3_81, %c0_82, %c0_83] : memref<8x4x128xf32, #tpu.memory_space<vmem>>, vector<1x4x128xf32>
    %260 = vector.shape_cast %259 : vector<1x4x128xf32> to vector<4x128xf32>
    %261 = vector.shape_cast %4 : vector<1x128xi1> to vector<1x128xi1>
    %262 = vector.broadcast %261 : vector<1x128xi1> to vector<4x128xi1>
    %263 = arith.select %262, %258, %260 : vector<4x128xi1>, vector<4x128xf32>
    %cst_84 = arith.constant dense<0.000000e+00> : vector<4x128xf32>
    %264 = tpu.matmul %235, %0, %cst_84 {dimension_numbers = #tpu.dot_dimension_numbers<[1], [0], [0], [1], [0, 0, 1, 1], [], []>} : vector<4x32xf32>, vector<32x128xf32>, vector<4x128xf32> -> vector<4x128xf32>
    %265 = arith.addf %263, %264 : vector<4x128xf32>
    %266 = vector.extract_strided_slice %265 {offsets = [0, 0], sizes = [4, 32], strides = [1, 1]} : vector<4x128xf32> to vector<4x32xf32>
    %267 = arith.negf %266 : vector<4x32xf32>
    %268 = math.exp %267 : vector<4x32xf32>
    %cst_85 = arith.constant 1.000000e+00 : f32
    %269 = vector.broadcast %cst_85 : f32 to vector<4x32xf32>
    %270 = arith.addf %269, %268 : vector<4x32xf32>
    %271 = arith.divf %269, %270 : vector<4x32xf32>
    %272 = vector.extract_strided_slice %265 {offsets = [0, 32], sizes = [4, 32], strides = [1, 1]} : vector<4x128xf32> to vector<4x32xf32>
    %273 = arith.negf %272 : vector<4x32xf32>
    %274 = math.exp %273 : vector<4x32xf32>
    %cst_86 = arith.constant 1.000000e+00 : f32
    %275 = vector.broadcast %cst_86 : f32 to vector<4x32xf32>
    %276 = arith.addf %275, %274 : vector<4x32xf32>
    %277 = arith.divf %275, %276 : vector<4x32xf32>
    %278 = vector.extract_strided_slice %265 {offsets = [0, 64], sizes = [4, 32], strides = [1, 1]} : vector<4x128xf32> to vector<4x32xf32>
    %279 = math.tanh %278 : vector<4x32xf32>
    %280 = vector.extract_strided_slice %265 {offsets = [0, 96], sizes = [4, 32], strides = [1, 1]} : vector<4x128xf32> to vector<4x32xf32>
    %281 = arith.negf %280 : vector<4x32xf32>
    %282 = math.exp %281 : vector<4x32xf32>
    %cst_87 = arith.constant 1.000000e+00 : f32
    %283 = vector.broadcast %cst_87 : f32 to vector<4x32xf32>
    %284 = arith.addf %283, %282 : vector<4x32xf32>
    %285 = arith.divf %283, %284 : vector<4x32xf32>
    %286 = arith.mulf %277, %236 : vector<4x32xf32>
    %287 = arith.mulf %271, %279 : vector<4x32xf32>
    %288 = arith.addf %286, %287 : vector<4x32xf32>
    %289 = math.tanh %288 : vector<4x32xf32>
    %290 = arith.mulf %285, %289 : vector<4x32xf32>
    %c4_i32_88 = arith.constant 4 : i32
    %c3_i32_89 = arith.constant 3 : i32
    %291 = vector.broadcast %c4_i32_88 : i32 to vector<1x32xi32>
    %292 = vector.broadcast %c3_i32_89 : i32 to vector<1x32xi32>
    %293 = arith.select %7, %291, %292 : vector<1x32xi1>, vector<1x32xi32>
    %294 = vector.broadcast %1 : vector<4x1xi32> to vector<4x32xi32>
    %295 = vector.broadcast %293 : vector<1x32xi32> to vector<4x32xi32>
    %296 = arith.cmpi sgt, %294, %295 : vector<4x32xi32>
    %297 = arith.select %296, %290, %235 : vector<4x32xi1>, vector<4x32xf32>
    %298 = arith.select %296, %288, %236 : vector<4x32xi1>, vector<4x32xf32>
    %c4_i32_90 = arith.constant 4 : i32
    %299 = vector.broadcast %c4_i32_90 : i32 to vector<4x1xi32>
    %300 = arith.cmpi sgt, %1, %299 : vector<4x1xi32>
    %c3_i32_91 = arith.constant 3 : i32
    %301 = vector.broadcast %c3_i32_91 : i32 to vector<4x1xi32>
    %302 = arith.cmpi sgt, %1, %301 : vector<4x1xi32>
    %303 = vector.extract_strided_slice %290 {offsets = [0, 0], sizes = [4, 16], strides = [1, 1]} : vector<4x32xf32> to vector<4x16xf32>
    %cst_92 = arith.constant 0.000000e+00 : f32
    %304 = vector.shape_cast %300 : vector<4x1xi1> to vector<4x1xi1>
    %305 = vector.broadcast %304 : vector<4x1xi1> to vector<4x16xi1>
    %306 = vector.broadcast %cst_92 : f32 to vector<4x16xf32>
    %307 = arith.select %305, %303, %306 : vector<4x16xi1>, vector<4x16xf32>
    %c4_93 = arith.constant 4 : index
    %c0_94 = arith.constant 0 : index
    %c0_95 = arith.constant 0 : index
    %308 = vector.load %arg4[%c4_93, %c0_94, %c0_95] : memref<8x4x32xf32, #tpu.memory_space<vmem>>, vector<1x4x16xf32>
    %309 = vector.shape_cast %308 : vector<1x4x16xf32> to vector<4x16xf32>
    %310 = vector.shape_cast %307 : vector<4x16xf32> to vector<1x4x16xf32>
    tpu.vector_store %arg4[%c4_93, %c0_94, %c0_95], %310 {strides = array<i32>} : memref<8x4x32xf32, #tpu.memory_space<vmem>>, vector<1x4x16xf32>,
    %311 = vector.extract_strided_slice %290 {offsets = [0, 16], sizes = [4, 16], strides = [1, 1]} : vector<4x32xf32> to vector<4x16xf32>
    %cst_96 = arith.constant 0.000000e+00 : f32
    %312 = vector.shape_cast %302 : vector<4x1xi1> to vector<4x1xi1>
    %313 = vector.broadcast %312 : vector<4x1xi1> to vector<4x16xi1>
    %314 = vector.broadcast %cst_96 : f32 to vector<4x16xf32>
    %315 = arith.select %313, %311, %314 : vector<4x16xi1>, vector<4x16xf32>
    %c3_97 = arith.constant 3 : index
    %c0_98 = arith.constant 0 : index
    %c16_99 = arith.constant 16 : index
    %316 = vector.load %arg4[%c3_97, %c0_98, %c16_99] : memref<8x4x32xf32, #tpu.memory_space<vmem>>, vector<1x4x16xf32>
    %317 = vector.shape_cast %316 : vector<1x4x16xf32> to vector<4x16xf32>
    %318 = vector.shape_cast %315 : vector<4x16xf32> to vector<1x4x16xf32>
    tpu.vector_store %arg4[%c3_97, %c0_98, %c16_99], %318 {strides = array<i32>} : memref<8x4x32xf32, #tpu.memory_space<vmem>>, vector<1x4x16xf32>,
    %c5_100 = arith.constant 5 : index
    %c0_101 = arith.constant 0 : index
    %c0_102 = arith.constant 0 : index
    %319 = vector.load %arg0[%c5_100, %c0_101, %c0_102] : memref<8x4x128xf32, #tpu.memory_space<vmem>>, vector<1x4x128xf32>
    %320 = vector.shape_cast %319 : vector<1x4x128xf32> to vector<4x128xf32>
    %c2_103 = arith.constant 2 : index
    %c0_104 = arith.constant 0 : index
    %c0_105 = arith.constant 0 : index
    %321 = vector.load %arg0[%c2_103, %c0_104, %c0_105] : memref<8x4x128xf32, #tpu.memory_space<vmem>>, vector<1x4x128xf32>
    %322 = vector.shape_cast %321 : vector<1x4x128xf32> to vector<4x128xf32>
    %323 = vector.shape_cast %4 : vector<1x128xi1> to vector<1x128xi1>
    %324 = vector.broadcast %323 : vector<1x128xi1> to vector<4x128xi1>
    %325 = arith.select %324, %320, %322 : vector<4x128xi1>, vector<4x128xf32>
    %cst_106 = arith.constant dense<0.000000e+00> : vector<4x128xf32>
    %326 = tpu.matmul %297, %0, %cst_106 {dimension_numbers = #tpu.dot_dimension_numbers<[1], [0], [0], [1], [0, 0, 1, 1], [], []>} : vector<4x32xf32>, vector<32x128xf32>, vector<4x128xf32> -> vector<4x128xf32>
    %327 = arith.addf %325, %326 : vector<4x128xf32>
    %328 = vector.extract_strided_slice %327 {offsets = [0, 0], sizes = [4, 32], strides = [1, 1]} : vector<4x128xf32> to vector<4x32xf32>
    %329 = arith.negf %328 : vector<4x32xf32>
    %330 = math.exp %329 : vector<4x32xf32>
    %cst_107 = arith.constant 1.000000e+00 : f32
    %331 = vector.broadcast %cst_107 : f32 to vector<4x32xf32>
    %332 = arith.addf %331, %330 : vector<4x32xf32>
    %333 = arith.divf %331, %332 : vector<4x32xf32>
    %334 = vector.extract_strided_slice %327 {offsets = [0, 32], sizes = [4, 32], strides = [1, 1]} : vector<4x128xf32> to vector<4x32xf32>
    %335 = arith.negf %334 : vector<4x32xf32>
    %336 = math.exp %335 : vector<4x32xf32>
    %cst_108 = arith.constant 1.000000e+00 : f32
    %337 = vector.broadcast %cst_108 : f32 to vector<4x32xf32>
    %338 = arith.addf %337, %336 : vector<4x32xf32>
    %339 = arith.divf %337, %338 : vector<4x32xf32>
    %340 = vector.extract_strided_slice %327 {offsets = [0, 64], sizes = [4, 32], strides = [1, 1]} : vector<4x128xf32> to vector<4x32xf32>
    %341 = math.tanh %340 : vector<4x32xf32>
    %342 = vector.extract_strided_slice %327 {offsets = [0, 96], sizes = [4, 32], strides = [1, 1]} : vector<4x128xf32> to vector<4x32xf32>
    %343 = arith.negf %342 : vector<4x32xf32>
    %344 = math.exp %343 : vector<4x32xf32>
    %cst_109 = arith.constant 1.000000e+00 : f32
    %345 = vector.broadcast %cst_109 : f32 to vector<4x32xf32>
    %346 = arith.addf %345, %344 : vector<4x32xf32>
    %347 = arith.divf %345, %346 : vector<4x32xf32>
    %348 = arith.mulf %339, %298 : vector<4x32xf32>
    %349 = arith.mulf %333, %341 : vector<4x32xf32>
    %350 = arith.addf %348, %349 : vector<4x32xf32>
    %351 = math.tanh %350 : vector<4x32xf32>
    %352 = arith.mulf %347, %351 : vector<4x32xf32>
    %c5_i32_110 = arith.constant 5 : i32
    %c2_i32_111 = arith.constant 2 : i32
    %353 = vector.broadcast %c5_i32_110 : i32 to vector<1x32xi32>
    %354 = vector.broadcast %c2_i32_111 : i32 to vector<1x32xi32>
    %355 = arith.select %7, %353, %354 : vector<1x32xi1>, vector<1x32xi32>
    %356 = vector.broadcast %1 : vector<4x1xi32> to vector<4x32xi32>
    %357 = vector.broadcast %355 : vector<1x32xi32> to vector<4x32xi32>
    %358 = arith.cmpi sgt, %356, %357 : vector<4x32xi32>
    %359 = arith.select %358, %352, %297 : vector<4x32xi1>, vector<4x32xf32>
    %360 = arith.select %358, %350, %298 : vector<4x32xi1>, vector<4x32xf32>
    %c5_i32_112 = arith.constant 5 : i32
    %361 = vector.broadcast %c5_i32_112 : i32 to vector<4x1xi32>
    %362 = arith.cmpi sgt, %1, %361 : vector<4x1xi32>
    %c2_i32_113 = arith.constant 2 : i32
    %363 = vector.broadcast %c2_i32_113 : i32 to vector<4x1xi32>
    %364 = arith.cmpi sgt, %1, %363 : vector<4x1xi32>
    %365 = vector.extract_strided_slice %352 {offsets = [0, 0], sizes = [4, 16], strides = [1, 1]} : vector<4x32xf32> to vector<4x16xf32>
    %cst_114 = arith.constant 0.000000e+00 : f32
    %366 = vector.shape_cast %362 : vector<4x1xi1> to vector<4x1xi1>
    %367 = vector.broadcast %366 : vector<4x1xi1> to vector<4x16xi1>
    %368 = vector.broadcast %cst_114 : f32 to vector<4x16xf32>
    %369 = arith.select %367, %365, %368 : vector<4x16xi1>, vector<4x16xf32>
    %c5_115 = arith.constant 5 : index
    %c0_116 = arith.constant 0 : index
    %c0_117 = arith.constant 0 : index
    %370 = vector.load %arg4[%c5_115, %c0_116, %c0_117] : memref<8x4x32xf32, #tpu.memory_space<vmem>>, vector<1x4x16xf32>
    %371 = vector.shape_cast %370 : vector<1x4x16xf32> to vector<4x16xf32>
    %372 = vector.shape_cast %369 : vector<4x16xf32> to vector<1x4x16xf32>
    tpu.vector_store %arg4[%c5_115, %c0_116, %c0_117], %372 {strides = array<i32>} : memref<8x4x32xf32, #tpu.memory_space<vmem>>, vector<1x4x16xf32>,
    %373 = vector.extract_strided_slice %352 {offsets = [0, 16], sizes = [4, 16], strides = [1, 1]} : vector<4x32xf32> to vector<4x16xf32>
    %cst_118 = arith.constant 0.000000e+00 : f32
    %374 = vector.shape_cast %364 : vector<4x1xi1> to vector<4x1xi1>
    %375 = vector.broadcast %374 : vector<4x1xi1> to vector<4x16xi1>
    %376 = vector.broadcast %cst_118 : f32 to vector<4x16xf32>
    %377 = arith.select %375, %373, %376 : vector<4x16xi1>, vector<4x16xf32>
    %c2_119 = arith.constant 2 : index
    %c0_120 = arith.constant 0 : index
    %c16_121 = arith.constant 16 : index
    %378 = vector.load %arg4[%c2_119, %c0_120, %c16_121] : memref<8x4x32xf32, #tpu.memory_space<vmem>>, vector<1x4x16xf32>
    %379 = vector.shape_cast %378 : vector<1x4x16xf32> to vector<4x16xf32>
    %380 = vector.shape_cast %377 : vector<4x16xf32> to vector<1x4x16xf32>
    tpu.vector_store %arg4[%c2_119, %c0_120, %c16_121], %380 {strides = array<i32>} : memref<8x4x32xf32, #tpu.memory_space<vmem>>, vector<1x4x16xf32>,
    %c6_122 = arith.constant 6 : index
    %c0_123 = arith.constant 0 : index
    %c0_124 = arith.constant 0 : index
    %381 = vector.load %arg0[%c6_122, %c0_123, %c0_124] : memref<8x4x128xf32, #tpu.memory_space<vmem>>, vector<1x4x128xf32>
    %382 = vector.shape_cast %381 : vector<1x4x128xf32> to vector<4x128xf32>
    %c1_125 = arith.constant 1 : index
    %c0_126 = arith.constant 0 : index
    %c0_127 = arith.constant 0 : index
    %383 = vector.load %arg0[%c1_125, %c0_126, %c0_127] : memref<8x4x128xf32, #tpu.memory_space<vmem>>, vector<1x4x128xf32>
    %384 = vector.shape_cast %383 : vector<1x4x128xf32> to vector<4x128xf32>
    %385 = vector.shape_cast %4 : vector<1x128xi1> to vector<1x128xi1>
    %386 = vector.broadcast %385 : vector<1x128xi1> to vector<4x128xi1>
    %387 = arith.select %386, %382, %384 : vector<4x128xi1>, vector<4x128xf32>
    %cst_128 = arith.constant dense<0.000000e+00> : vector<4x128xf32>
    %388 = tpu.matmul %359, %0, %cst_128 {dimension_numbers = #tpu.dot_dimension_numbers<[1], [0], [0], [1], [0, 0, 1, 1], [], []>} : vector<4x32xf32>, vector<32x128xf32>, vector<4x128xf32> -> vector<4x128xf32>
    %389 = arith.addf %387, %388 : vector<4x128xf32>
    %390 = vector.extract_strided_slice %389 {offsets = [0, 0], sizes = [4, 32], strides = [1, 1]} : vector<4x128xf32> to vector<4x32xf32>
    %391 = arith.negf %390 : vector<4x32xf32>
    %392 = math.exp %391 : vector<4x32xf32>
    %cst_129 = arith.constant 1.000000e+00 : f32
    %393 = vector.broadcast %cst_129 : f32 to vector<4x32xf32>
    %394 = arith.addf %393, %392 : vector<4x32xf32>
    %395 = arith.divf %393, %394 : vector<4x32xf32>
    %396 = vector.extract_strided_slice %389 {offsets = [0, 32], sizes = [4, 32], strides = [1, 1]} : vector<4x128xf32> to vector<4x32xf32>
    %397 = arith.negf %396 : vector<4x32xf32>
    %398 = math.exp %397 : vector<4x32xf32>
    %cst_130 = arith.constant 1.000000e+00 : f32
    %399 = vector.broadcast %cst_130 : f32 to vector<4x32xf32>
    %400 = arith.addf %399, %398 : vector<4x32xf32>
    %401 = arith.divf %399, %400 : vector<4x32xf32>
    %402 = vector.extract_strided_slice %389 {offsets = [0, 64], sizes = [4, 32], strides = [1, 1]} : vector<4x128xf32> to vector<4x32xf32>
    %403 = math.tanh %402 : vector<4x32xf32>
    %404 = vector.extract_strided_slice %389 {offsets = [0, 96], sizes = [4, 32], strides = [1, 1]} : vector<4x128xf32> to vector<4x32xf32>
    %405 = arith.negf %404 : vector<4x32xf32>
    %406 = math.exp %405 : vector<4x32xf32>
    %cst_131 = arith.constant 1.000000e+00 : f32
    %407 = vector.broadcast %cst_131 : f32 to vector<4x32xf32>
    %408 = arith.addf %407, %406 : vector<4x32xf32>
    %409 = arith.divf %407, %408 : vector<4x32xf32>
    %410 = arith.mulf %401, %360 : vector<4x32xf32>
    %411 = arith.mulf %395, %403 : vector<4x32xf32>
    %412 = arith.addf %410, %411 : vector<4x32xf32>
    %413 = math.tanh %412 : vector<4x32xf32>
    %414 = arith.mulf %409, %413 : vector<4x32xf32>
    %c6_i32_132 = arith.constant 6 : i32
    %c1_i32_133 = arith.constant 1 : i32
    %415 = vector.broadcast %c6_i32_132 : i32 to vector<1x32xi32>
    %416 = vector.broadcast %c1_i32_133 : i32 to vector<1x32xi32>
    %417 = arith.select %7, %415, %416 : vector<1x32xi1>, vector<1x32xi32>
    %418 = vector.broadcast %1 : vector<4x1xi32> to vector<4x32xi32>
    %419 = vector.broadcast %417 : vector<1x32xi32> to vector<4x32xi32>
    %420 = arith.cmpi sgt, %418, %419 : vector<4x32xi32>
    %421 = arith.select %420, %414, %359 : vector<4x32xi1>, vector<4x32xf32>
    %422 = arith.select %420, %412, %360 : vector<4x32xi1>, vector<4x32xf32>
    %c6_i32_134 = arith.constant 6 : i32
    %423 = vector.broadcast %c6_i32_134 : i32 to vector<4x1xi32>
    %424 = arith.cmpi sgt, %1, %423 : vector<4x1xi32>
    %c1_i32_135 = arith.constant 1 : i32
    %425 = vector.broadcast %c1_i32_135 : i32 to vector<4x1xi32>
    %426 = arith.cmpi sgt, %1, %425 : vector<4x1xi32>
    %427 = vector.extract_strided_slice %414 {offsets = [0, 0], sizes = [4, 16], strides = [1, 1]} : vector<4x32xf32> to vector<4x16xf32>
    %cst_136 = arith.constant 0.000000e+00 : f32
    %428 = vector.shape_cast %424 : vector<4x1xi1> to vector<4x1xi1>
    %429 = vector.broadcast %428 : vector<4x1xi1> to vector<4x16xi1>
    %430 = vector.broadcast %cst_136 : f32 to vector<4x16xf32>
    %431 = arith.select %429, %427, %430 : vector<4x16xi1>, vector<4x16xf32>
    %c6_137 = arith.constant 6 : index
    %c0_138 = arith.constant 0 : index
    %c0_139 = arith.constant 0 : index
    %432 = vector.load %arg4[%c6_137, %c0_138, %c0_139] : memref<8x4x32xf32, #tpu.memory_space<vmem>>, vector<1x4x16xf32>
    %433 = vector.shape_cast %432 : vector<1x4x16xf32> to vector<4x16xf32>
    %434 = vector.shape_cast %431 : vector<4x16xf32> to vector<1x4x16xf32>
    tpu.vector_store %arg4[%c6_137, %c0_138, %c0_139], %434 {strides = array<i32>} : memref<8x4x32xf32, #tpu.memory_space<vmem>>, vector<1x4x16xf32>,
    %435 = vector.extract_strided_slice %414 {offsets = [0, 16], sizes = [4, 16], strides = [1, 1]} : vector<4x32xf32> to vector<4x16xf32>
    %cst_140 = arith.constant 0.000000e+00 : f32
    %436 = vector.shape_cast %426 : vector<4x1xi1> to vector<4x1xi1>
    %437 = vector.broadcast %436 : vector<4x1xi1> to vector<4x16xi1>
    %438 = vector.broadcast %cst_140 : f32 to vector<4x16xf32>
    %439 = arith.select %437, %435, %438 : vector<4x16xi1>, vector<4x16xf32>
    %c1_141 = arith.constant 1 : index
    %c0_142 = arith.constant 0 : index
    %c16_143 = arith.constant 16 : index
    %440 = vector.load %arg4[%c1_141, %c0_142, %c16_143] : memref<8x4x32xf32, #tpu.memory_space<vmem>>, vector<1x4x16xf32>
    %441 = vector.shape_cast %440 : vector<1x4x16xf32> to vector<4x16xf32>
    %442 = vector.shape_cast %439 : vector<4x16xf32> to vector<1x4x16xf32>
    tpu.vector_store %arg4[%c1_141, %c0_142, %c16_143], %442 {strides = array<i32>} : memref<8x4x32xf32, #tpu.memory_space<vmem>>, vector<1x4x16xf32>,
    %c7_144 = arith.constant 7 : index
    %c0_145 = arith.constant 0 : index
    %c0_146 = arith.constant 0 : index
    %443 = vector.load %arg0[%c7_144, %c0_145, %c0_146] : memref<8x4x128xf32, #tpu.memory_space<vmem>>, vector<1x4x128xf32>
    %444 = vector.shape_cast %443 : vector<1x4x128xf32> to vector<4x128xf32>
    %c0_147 = arith.constant 0 : index
    %c0_148 = arith.constant 0 : index
    %c0_149 = arith.constant 0 : index
    %445 = vector.load %arg0[%c0_147, %c0_148, %c0_149] : memref<8x4x128xf32, #tpu.memory_space<vmem>>, vector<1x4x128xf32>
    %446 = vector.shape_cast %445 : vector<1x4x128xf32> to vector<4x128xf32>
    %447 = vector.shape_cast %4 : vector<1x128xi1> to vector<1x128xi1>
    %448 = vector.broadcast %447 : vector<1x128xi1> to vector<4x128xi1>
    %449 = arith.select %448, %444, %446 : vector<4x128xi1>, vector<4x128xf32>
    %cst_150 = arith.constant dense<0.000000e+00> : vector<4x128xf32>
    %450 = tpu.matmul %421, %0, %cst_150 {dimension_numbers = #tpu.dot_dimension_numbers<[1], [0], [0], [1], [0, 0, 1, 1], [], []>} : vector<4x32xf32>, vector<32x128xf32>, vector<4x128xf32> -> vector<4x128xf32>
    %451 = arith.addf %449, %450 : vector<4x128xf32>
    %452 = vector.extract_strided_slice %451 {offsets = [0, 0], sizes = [4, 32], strides = [1, 1]} : vector<4x128xf32> to vector<4x32xf32>
    %453 = arith.negf %452 : vector<4x32xf32>
    %454 = math.exp %453 : vector<4x32xf32>
    %cst_151 = arith.constant 1.000000e+00 : f32
    %455 = vector.broadcast %cst_151 : f32 to vector<4x32xf32>
    %456 = arith.addf %455, %454 : vector<4x32xf32>
    %457 = arith.divf %455, %456 : vector<4x32xf32>
    %458 = vector.extract_strided_slice %451 {offsets = [0, 32], sizes = [4, 32], strides = [1, 1]} : vector<4x128xf32> to vector<4x32xf32>
    %459 = arith.negf %458 : vector<4x32xf32>
    %460 = math.exp %459 : vector<4x32xf32>
    %cst_152 = arith.constant 1.000000e+00 : f32
    %461 = vector.broadcast %cst_152 : f32 to vector<4x32xf32>
    %462 = arith.addf %461, %460 : vector<4x32xf32>
    %463 = arith.divf %461, %462 : vector<4x32xf32>
    %464 = vector.extract_strided_slice %451 {offsets = [0, 64], sizes = [4, 32], strides = [1, 1]} : vector<4x128xf32> to vector<4x32xf32>
    %465 = math.tanh %464 : vector<4x32xf32>
    %466 = vector.extract_strided_slice %451 {offsets = [0, 96], sizes = [4, 32], strides = [1, 1]} : vector<4x128xf32> to vector<4x32xf32>
    %467 = arith.negf %466 : vector<4x32xf32>
    %468 = math.exp %467 : vector<4x32xf32>
    %cst_153 = arith.constant 1.000000e+00 : f32
    %469 = vector.broadcast %cst_153 : f32 to vector<4x32xf32>
    %470 = arith.addf %469, %468 : vector<4x32xf32>
    %471 = arith.divf %469, %470 : vector<4x32xf32>
    %472 = arith.mulf %463, %422 : vector<4x32xf32>
    %473 = arith.mulf %457, %465 : vector<4x32xf32>
    %474 = arith.addf %472, %473 : vector<4x32xf32>
    %475 = math.tanh %474 : vector<4x32xf32>
    %476 = arith.mulf %471, %475 : vector<4x32xf32>
    %c7_i32_154 = arith.constant 7 : i32
    %c0_i32_155 = arith.constant 0 : i32
    %477 = vector.broadcast %c7_i32_154 : i32 to vector<1x32xi32>
    %478 = vector.broadcast %c0_i32_155 : i32 to vector<1x32xi32>
    %479 = arith.select %7, %477, %478 : vector<1x32xi1>, vector<1x32xi32>
    %480 = vector.broadcast %1 : vector<4x1xi32> to vector<4x32xi32>
    %481 = vector.broadcast %479 : vector<1x32xi32> to vector<4x32xi32>
    %482 = arith.cmpi sgt, %480, %481 : vector<4x32xi32>
    %483 = arith.select %482, %476, %421 : vector<4x32xi1>, vector<4x32xf32>
    %c7_i32_156 = arith.constant 7 : i32
    %484 = vector.broadcast %c7_i32_156 : i32 to vector<4x1xi32>
    %485 = arith.cmpi sgt, %1, %484 : vector<4x1xi32>
    %c0_i32_157 = arith.constant 0 : i32
    %486 = vector.broadcast %c0_i32_157 : i32 to vector<4x1xi32>
    %487 = arith.cmpi sgt, %1, %486 : vector<4x1xi32>
    %488 = vector.extract_strided_slice %476 {offsets = [0, 0], sizes = [4, 16], strides = [1, 1]} : vector<4x32xf32> to vector<4x16xf32>
    %cst_158 = arith.constant 0.000000e+00 : f32
    %489 = vector.shape_cast %485 : vector<4x1xi1> to vector<4x1xi1>
    %490 = vector.broadcast %489 : vector<4x1xi1> to vector<4x16xi1>
    %491 = vector.broadcast %cst_158 : f32 to vector<4x16xf32>
    %492 = arith.select %490, %488, %491 : vector<4x16xi1>, vector<4x16xf32>
    %c7_159 = arith.constant 7 : index
    %c0_160 = arith.constant 0 : index
    %c0_161 = arith.constant 0 : index
    %493 = vector.load %arg4[%c7_159, %c0_160, %c0_161] : memref<8x4x32xf32, #tpu.memory_space<vmem>>, vector<1x4x16xf32>
    %494 = vector.shape_cast %493 : vector<1x4x16xf32> to vector<4x16xf32>
    %495 = vector.shape_cast %492 : vector<4x16xf32> to vector<1x4x16xf32>
    tpu.vector_store %arg4[%c7_159, %c0_160, %c0_161], %495 {strides = array<i32>} : memref<8x4x32xf32, #tpu.memory_space<vmem>>, vector<1x4x16xf32>,
    %496 = vector.extract_strided_slice %476 {offsets = [0, 16], sizes = [4, 16], strides = [1, 1]} : vector<4x32xf32> to vector<4x16xf32>
    %cst_162 = arith.constant 0.000000e+00 : f32
    %497 = vector.shape_cast %487 : vector<4x1xi1> to vector<4x1xi1>
    %498 = vector.broadcast %497 : vector<4x1xi1> to vector<4x16xi1>
    %499 = vector.broadcast %cst_162 : f32 to vector<4x16xf32>
    %500 = arith.select %498, %496, %499 : vector<4x16xi1>, vector<4x16xf32>
    %c0_163 = arith.constant 0 : index
    %c0_164 = arith.constant 0 : index
    %c16_165 = arith.constant 16 : index
    %501 = vector.load %arg4[%c0_163, %c0_164, %c16_165] : memref<8x4x32xf32, #tpu.memory_space<vmem>>, vector<1x4x16xf32>
    %502 = vector.shape_cast %501 : vector<1x4x16xf32> to vector<4x16xf32>
    %503 = vector.shape_cast %500 : vector<4x16xf32> to vector<1x4x16xf32>
    tpu.vector_store %arg4[%c0_163, %c0_164, %c16_165], %503 {strides = array<i32>} : memref<8x4x32xf32, #tpu.memory_space<vmem>>, vector<1x4x16xf32>,
    %c0_166 = arith.constant 0 : index
    %c0_167 = arith.constant 0 : index
    %504 = vector.load %arg5[%c0_166, %c0_167] : memref<4x32xf32, #tpu.memory_space<vmem>>, vector<4x32xf32>
    tpu.vector_store %arg5[%c0_166, %c0_167], %483 {strides = array<i32>} : memref<4x32xf32, #tpu.memory_space<vmem>>, vector<4x32xf32>,
    return
  }
}

</mosaic_0001>

<llo_original>
// kernel: bilstm_forward.1
$region0: #{bilstm_forward.1}
  #allocation0 [shape = 'u32[]', space=smem, size = 0x4, offset = 0x4, fixed_abs, tag = 'smem constant byte address 0x4 - core index']
  #allocation1 [shape = 'u32[144,128]{1,0:T(1,128)}', space=vmem, size = 0x12000, scoped, tag = 'internal scratch']
  %s0 = inlined_call_operand.vmem [shape: f32[8,4,128], index: 0, kind: input, shape index: {}]
  %s1 = inlined_call_operand.vmem [shape: s32[4,1], index: 1, kind: input, shape index: {}]
  %s2 = inlined_call_operand.vmem [shape: f32[32,128], index: 2, kind: input, shape index: {}]
  %s3 = inlined_call_operand.vmem [shape: s32[1,128], index: 3, kind: input, shape index: {}]
  %s4 = inlined_call_operand.vmem [shape: f32[8,4,32], index: 4, kind: output, shape index: {0}]
  %s5 = inlined_call_operand.hbm [shape: f32[4,32], index: 5, kind: output, shape index: {1}]
  %6 = xla_tuple %s4, %s5
  %s7 = sld [smem:[#allocation0]]
  $region34: #{bilstm_forward.1} parent=0
    _
  %s9 = ssub.s32 1, %s7
  %s10 = scalar_select 0, %s9, %s7
  $region1: #{bilstm_forward.1} parent=0
    #allocation2 [shape = 'u8[2048]{0}', space=vmem, size = 0x800, scoped, tag = 'output window, operand 1, single buffered']
    #allocation3 [shape = 's32[1]{0}', space=sflag, size = 0x4, scoped, tag = 'scoped memory for bilstm_forward.1']
    %11 = vsyncpa [#allocation3], 0
    // Predicated region
    $region2: #{bilstm_forward.1} parent=1 // pred_check
      _
    $region3: #{bilstm_forward.1} parent=1 // pred_check_branch
      %13 = sbr.rel (0) target = $region5
    $region4: #{bilstm_forward.1} parent=1 // pred_region
      _
    $region5: #{bilstm_forward.1} parent=1 // pred_fallthru
      _
    // Predicated region
    $region6: #{bilstm_forward.1} parent=1 // pred_check
      _
    $region7: #{bilstm_forward.1} parent=1 // pred_check_branch
      %15 = sbr.rel (0) target = $region9
    $region8: #{bilstm_forward.1} parent=1 // pred_region
      _
    $region9: #{bilstm_forward.1} parent=1 // pred_fallthru
      _
    // Predicated region
    $region10: #{bilstm_forward.1} parent=1 // pred_check
      _
    $region11: #{bilstm_forward.1} parent=1 // pred_check_branch
      %17 = sbr.rel (0) target = $region13
    $region12: #{bilstm_forward.1} parent=1 // pred_region
      _
    $region13: #{bilstm_forward.1} parent=1 // pred_fallthru
      _
    // Predicated region
    $region14: #{bilstm_forward.1} parent=1 // pred_check
      _
    $region15: #{bilstm_forward.1} parent=1 // pred_check_branch
      %19 = sbr.rel (0) target = $region17
    $region16: #{bilstm_forward.1} parent=1 // pred_region
      _
    $region17: #{bilstm_forward.1} parent=1 // pred_fallthru
      _
    %v20 = vld [vmem:[%s2] sm:$0xff]
    %v21 = vld [vmem:[%s2 + $0x8] sm:$0xff]
    %v22 = vld [vmem:[%s2 + $0x10] sm:$0xff]
    %v23 = vld [vmem:[%s2 + $0x18] sm:$0xff]
    %v24 = vld [vmem:[%s1] sm:$0xf]
    %v25 = vld [vmem:[%s3] sm:$0x1]
    %vm26 = vcmp.eq.s32.totalorder %v25, 0
    %v27 = vlaneseq
    %v28 = vand.u32 %v27, 127
    %vm29 = vcmp.lt.s32.totalorder %v28, 16
    %v30 = vld [vmem:[%s0] sm:$0xf]
    %s31 = scalar_lea.vmem %s0, 28
    %v32 = vld [vmem:[%s31] sm:$0xf]
    %v33 = vsel %vm26, 1, 0
    %v34 = vlaneseq
    %v35 = vshrl.u32 %v34, 7
    %v36 = vsub.s32 0, %v35
    %v37 = vrot.slane %v33, %v36
    %vm38 = vcmp.eq.s32.totalorder %v37, 1
    %v39 = vsel %vm38, %v30, %v32
    %vm40 = vcmask 261120
    %v42 = vsel %vm40, 0.0, 0
    %44 = vmatprep.subr.mxu0 0.0
    %45 = vmatpush1.msra.mxu0 0.0
    %46 = vmatprep.subr.mxu0 0.0
    %47 = vmatpush1.msra.mxu0 0.0
    %48 = vmatprep.subr.mxu0 0.0
    %49 = vmatpush1.msra.mxu0 0.0
    %50 = vmatprep.subr.mxu0 0.0
    %51 = vmatpush1.msra.mxu0 0.0
    %52 = vmatprep.subr.mxu0 0.0
    %53 = vmatpush1.msra.mxu0 0.0
    %54 = vmatprep.subr.mxu0 0.0
    %55 = vmatpush1.msra.mxu0 0.0
    %56 = vmatprep.subr.mxu0 0.0
    %57 = vmatpush1.msra.mxu0 0.0
    %58 = vmatprep.subr.mxu0 0.0
    %59 = vmatpush1.msra.mxu0 0.0
    %60 = vmatprep.subr.mxu0 0.0
    %61 = vmatpush1.msra.mxu0 0.0
    %62 = vmatprep.subr.mxu0 0.0
    %63 = vmatpush1.msra.mxu0 0.0
    %64 = vmatprep.subr.mxu0 0.0
    %65 = vmatpush1.msra.mxu0 0.0
    %66 = vmatprep.subr.mxu0 0.0
    %67 = vmatpush1.msra.mxu0 0.0
    %68 = vmatprep.subr.mxu0 0.0
    %69 = vmatpush1.msra.mxu0 %v23
    %70 = vmatprep.subr.mxu0 0.0
    %71 = vmatpush1.msra.mxu0 %v22
    %72 = vmatprep.subr.mxu0 0.0
    %73 = vmatpush1.msra.mxu0 %v21
    %74 = vmatprep.subr.mxu0 0.0
    %75 = vmatpush1.msra.mxu0 %v20
    %76 = vmatprep.subr.mxu0 0.0
    %77 = vmatpush2.msra.mxu0 0.0
    %78 = vmatprep.subr.mxu0 0.0
    %79 = vmatpush2.msra.mxu0 0.0
    %80 = vmatprep.subr.mxu0 0.0
    %81 = vmatpush2.msra.mxu0 0.0
    %82 = vmatprep.subr.mxu0 0.0
    %83 = vmatpush2.msra.mxu0 0.0
    %84 = vmatprep.subr.mxu0 0.0
    %85 = vmatpush2.msra.mxu0 0.0
    %86 = vmatprep.subr.mxu0 0.0
    %87 = vmatpush2.msra.mxu0 0.0
    %88 = vmatprep.subr.mxu0 0.0
    %89 = vmatpush2.msra.mxu0 0.0
    %90 = vmatprep.subr.mxu0 0.0
    %91 = vmatpush2.msra.mxu0 0.0
    %92 = vmatprep.subr.mxu0 0.0
    %93 = vmatpush2.msra.mxu0 0.0
    %94 = vmatprep.subr.mxu0 0.0
    %95 = vmatpush2.msra.mxu0 0.0
    %96 = vmatprep.subr.mxu0 0.0
    %97 = vmatpush2.msra.mxu0 0.0
    %98 = vmatprep.subr.mxu0 0.0
    %99 = vmatpush2.msra.mxu0 0.0
    %100 = vmatprep.subr.mxu0 0.0
    %101 = vmatpush2.msra.mxu0 0.0
    %102 = vmatprep.subr.mxu0 0.0
    %103 = vmatpush2.msra.mxu0 0.0
    %104 = vmatprep.subr.mxu0 0.0
    %105 = vmatpush2.msra.mxu0 0.0
    %106 = vmatprep.subr.mxu0 0.0
    %107 = vmatpush2.msra.mxu0 0.0
    %108 = vmatprep.mubr.f32.mxu0 0.0
    %109 = vmatmul.mubr.f32.gmra.mxu0 %v42
    %v110 = vpop.f32.mrf.mxu0
    %v111 = vadd.f32 0.0, %v110
    %v112 = vpop.f32.mrf.mxu0
    %113 = vdwg.mxu0
    %v114 = vadd.f32 %v39, %v111
    %v115 = vxor.u32 %v114, 2147483648
    %v116 = vmul.f32 %v115, 1.442695
    %v117 = vpow.pop %v116
    %v118 = vadd.f32 %v117, 1.0
    %v119 = vrcp.pop %v118
    %v120 = vmul.f32 1.0, %v119
    %v121 = vtanh.pop %v114
    %v122 = vmul.f32 %v120, 0.0
    %124 = vrot.lane.b32.xlu0 %v121, 64
    %v125 = vpop.permute.xlu0 %124
    %v127 = vmul.f32 %v120, %v125
    %129 = vrot.lane.b32.xlu0 %v127, 32
    %v130 = vpop.permute.xlu0 %129
    %v132 = vadd.f32 %v122, %v130
    %v133 = vtanh.pop %v132
    %135 = vrot.lane.b32.xlu0 %v133, 64
    %v136 = vpop.permute.xlu0 %135
    %v138 = vmul.f32 %v120, %v136
    %v139 = vsel %vm29, 0, 7
    %140 = vset.pattern.permute.xlu0 0
    %141 = vperm.xlu0 %140, %v24
    %v142 = vpop.permute.xlu0 %141
    %vm143 = vcmp.gt.s32.totalorder %v142, %v139
    %145 = vrot.lane.b32.xlu0 %v138, 32
    %v146 = vpop.permute.xlu0 %145
    %v148 = vsel %vm143, %v146, 0.0
    %150 = vrot.lane.b32.xlu0 %v132, 96
    %v151 = vpop.permute.xlu0 %150
    %v153 = vsel %vm143, %v151, 0.0
    %vm154 = vcmp.gt.s32.totalorder %v24, 0
    %vm155 = vcmp.gt.s32.totalorder %v24, 7
    %v156 = vsel %vm154, 1, 0
    %157 = vset.pattern.permute.xlu0 0
    %158 = vperm.xlu0 %157, %v156
    %v159 = vpop.permute.xlu0 %158
    %vm160 = vcmp.eq.s32.totalorder %v159, 1
    %v161 = vsel %vm160, %v138, 0.0
    %163 = vrot.lane.b32.xlu0 %v161, 32
    %v164 = vpop.permute.xlu0 %163
    %vm166 = vcmask 125952
    %167 = vst.msk [vmem:[%s4] sm:$0xf] %vm166, %v164
    %v168 = vsel %vm155, 1, 0
    %169 = vset.pattern.permute.xlu0 0
    %170 = vperm.xlu0 %169, %v168
    %v171 = vpop.permute.xlu0 %170
    %vm172 = vcmp.eq.s32.totalorder %v171, 1
    %v173 = vsel %vm172, %v138, 0.0
    %175 = vrot.lane.b32.xlu0 %v173, 32
    %v176 = vpop.permute.xlu0 %175
    %s178 = scalar_lea.vmem %s4, 28
    %vm179 = vcmask 257152
    %180 = vst.msk [vmem:[%s178] sm:$0xf] %vm179, %v176
    %s181 = scalar_lea.vmem %s0, 4
    %v182 = vld [vmem:[%s181] sm:$0xf]
    %s183 = scalar_lea.vmem %s0, 24
    %v184 = vld [vmem:[%s183] sm:$0xf]
    %v185 = vsel %vm38, %v182, %v184
    %v187 = vsel %vm40, %v148, 0
    %189 = vmatprep.subr.mxu0 0.0
    %190 = vmatpush1.msra.mxu0 0.0
    %191 = vmatprep.subr.mxu0 0.0
    %192 = vmatpush1.msra.mxu0 0.0
    %193 = vmatprep.subr.mxu0 0.0
    %194 = vmatpush1.msra.mxu0 0.0
    %195 = vmatprep.subr.mxu0 0.0
    %196 = vmatpush1.msra.mxu0 0.0
    %197 = vmatprep.subr.mxu0 0.0
    %198 = vmatpush1.msra.mxu0 0.0
    %199 = vmatprep.subr.mxu0 0.0
    %200 = vmatpush1.msra.mxu0 0.0
    %201 = vmatprep.subr.mxu0 0.0
    %202 = vmatpush1.msra.mxu0 0.0
    %203 = vmatprep.subr.mxu0 0.0
    %204 = vmatpush1.msra.mxu0 0.0
    %205 = vmatprep.subr.mxu0 0.0
    %206 = vmatpush1.msra.mxu0 0.0
    %207 = vmatprep.subr.mxu0 0.0
    %208 = vmatpush1.msra.mxu0 0.0
    %209 = vmatprep.subr.mxu0 0.0
    %210 = vmatpush1.msra.mxu0 0.0
    %211 = vmatprep.subr.mxu0 0.0
    %212 = vmatpush1.msra.mxu0 0.0
    %213 = vmatprep.subr.mxu0 0.0
    %214 = vmatpush1.msra.mxu0 %v23
    %215 = vmatprep.subr.mxu0 0.0
    %216 = vmatpush1.msra.mxu0 %v22
    %217 = vmatprep.subr.mxu0 0.0
    %218 = vmatpush1.msra.mxu0 %v21
    %219 = vmatprep.subr.mxu0 0.0
    %220 = vmatpush1.msra.mxu0 %v20
    %221 = vmatprep.subr.mxu0 0.0
    %222 = vmatpush2.msra.mxu0 0.0
    %223 = vmatprep.subr.mxu0 0.0
    %224 = vmatpush2.msra.mxu0 0.0
    %225 = vmatprep.subr.mxu0 0.0
    %226 = vmatpush2.msra.mxu0 0.0
    %227 = vmatprep.subr.mxu0 0.0
    %228 = vmatpush2.msra.mxu0 0.0
    %229 = vmatprep.subr.mxu0 0.0
    %230 = vmatpush2.msra.mxu0 0.0
    %231 = vmatprep.subr.mxu0 0.0
    %232 = vmatpush2.msra.mxu0 0.0
    %233 = vmatprep.subr.mxu0 0.0
    %234 = vmatpush2.msra.mxu0 0.0
    %235 = vmatprep.subr.mxu0 0.0
    %236 = vmatpush2.msra.mxu0 0.0
    %237 = vmatprep.subr.mxu0 0.0
    %238 = vmatpush2.msra.mxu0 0.0
    %239 = vmatprep.subr.mxu0 0.0
    %240 = vmatpush2.msra.mxu0 0.0
    %241 = vmatprep.subr.mxu0 0.0
    %242 = vmatpush2.msra.mxu0 0.0
    %243 = vmatprep.subr.mxu0 0.0
    %244 = vmatpush2.msra.mxu0 0.0
    %245 = vmatprep.subr.mxu0 0.0
    %246 = vmatpush2.msra.mxu0 0.0
    %247 = vmatprep.subr.mxu0 0.0
    %248 = vmatpush2.msra.mxu0 0.0
    %249 = vmatprep.subr.mxu0 0.0
    %250 = vmatpush2.msra.mxu0 0.0
    %251 = vmatprep.subr.mxu0 0.0
    %252 = vmatpush2.msra.mxu0 0.0
    %253 = vmatprep.mubr.f32.mxu0 0.0
    %254 = vmatmul.mubr.f32.gmra.mxu0 %v187
    %v255 = vpop.f32.mrf.mxu0
    %v256 = vadd.f32 0.0, %v255
    %v257 = vpop.f32.mrf.mxu0
    %258 = vdwg.mxu0
    %v259 = vadd.f32 %v185, %v256
    %v260 = vxor.u32 %v259, 2147483648
    %v261 = vmul.f32 %v260, 1.442695
    %v262 = vpow.pop %v261
    %v263 = vadd.f32 %v262, 1.0
    %v264 = vrcp.pop %v263
    %v265 = vmul.f32 1.0, %v264
    %v266 = vtanh.pop %v259
    %268 = vrot.lane.b32.xlu0 %v153, 32
    %v269 = vpop.permute.xlu0 %268
    %v271 = vmul.f32 %v265, %v269
    %273 = vrot.lane.b32.xlu0 %v266, 64
    %v274 = vpop.permute.xlu0 %273
    %v276 = vmul.f32 %v265, %v274
    %278 = vrot.lane.b32.xlu0 %v276, 32
    %v279 = vpop.permute.xlu0 %278
    %v281 = vadd.f32 %v271, %v279
    %v282 = vtanh.pop %v281
    %284 = vrot.lane.b32.xlu0 %v282, 64
    %v285 = vpop.permute.xlu0 %284
    %v287 = vmul.f32 %v265, %v285
    %v288 = vsel %vm29, 1, 6
    %vm289 = vcmp.gt.s32.totalorder %v142, %v288
    %291 = vrot.lane.b32.xlu0 %v287, 32
    %v292 = vpop.permute.xlu0 %291
    %v294 = vsel %vm289, %v292, %v148
    %296 = vrot.lane.b32.xlu0 %v281, 96
    %v297 = vpop.permute.xlu0 %296
    %v299 = vsel %vm289, %v297, %v153
    %vm300 = vcmp.gt.s32.totalorder %v24, 1
    %vm301 = vcmp.gt.s32.totalorder %v24, 6
    %v302 = vsel %vm300, 1, 0
    %303 = vset.pattern.permute.xlu0 0
    %304 = vperm.xlu0 %303, %v302
    %v305 = vpop.permute.xlu0 %304
    %vm306 = vcmp.eq.s32.totalorder %v305, 1
    %v307 = vsel %vm306, %v287, 0.0
    %309 = vrot.lane.b32.xlu0 %v307, 32
    %v310 = vpop.permute.xlu0 %309
    %s312 = scalar_lea.vmem %s4, 4
    %313 = vst.msk [vmem:[%s312] sm:$0xf] %vm166, %v310
    %v314 = vsel %vm301, 1, 0
    %315 = vset.pattern.permute.xlu0 0
    %316 = vperm.xlu0 %315, %v314
    %v317 = vpop.permute.xlu0 %316
    %vm318 = vcmp.eq.s32.totalorder %v317, 1
    %v319 = vsel %vm318, %v287, 0.0
    %321 = vrot.lane.b32.xlu0 %v319, 32
    %v322 = vpop.permute.xlu0 %321
    %s324 = scalar_lea.vmem %s4, 24
    %325 = vst.msk [vmem:[%s324] sm:$0xf] %vm179, %v322
    %s326 = scalar_lea.vmem %s0, 8
    %v327 = vld [vmem:[%s326] sm:$0xf]
    %s328 = scalar_lea.vmem %s0, 20
    %v329 = vld [vmem:[%s328] sm:$0xf]
    %v330 = vsel %vm38, %v327, %v329
    %v332 = vsel %vm40, %v294, 0
    %334 = vmatprep.subr.mxu0 0.0
    %335 = vmatpush1.msra.mxu0 0.0
    %336 = vmatprep.subr.mxu0 0.0
    %337 = vmatpush1.msra.mxu0 0.0
    %338 = vmatprep.subr.mxu0 0.0
    %339 = vmatpush1.msra.mxu0 0.0
    %340 = vmatprep.subr.mxu0 0.0
    %341 = vmatpush1.msra.mxu0 0.0
    %342 = vmatprep.subr.mxu0 0.0
    %343 = vmatpush1.msra.mxu0 0.0
    %344 = vmatprep.subr.mxu0 0.0
    %345 = vmatpush1.msra.mxu0 0.0
    %346 = vmatprep.subr.mxu0 0.0
    %347 = vmatpush1.msra.mxu0 0.0
    %348 = vmatprep.subr.mxu0 0.0
    %349 = vmatpush1.msra.mxu0 0.0
    %350 = vmatprep.subr.mxu0 0.0
    %351 = vmatpush1.msra.mxu0 0.0
    %352 = vmatprep.subr.mxu0 0.0
    %353 = vmatpush1.msra.mxu0 0.0
    %354 = vmatprep.subr.mxu0 0.0
    %355 = vmatpush1.msra.mxu0 0.0
    %356 = vmatprep.subr.mxu0 0.0
    %357 = vmatpush1.msra.mxu0 0.0
    %358 = vmatprep.subr.mxu0 0.0
    %359 = vmatpush1.msra.mxu0 %v23
    %360 = vmatprep.subr.mxu0 0.0
    %361 = vmatpush1.msra.mxu0 %v22
    %362 = vmatprep.subr.mxu0 0.0
    %363 = vmatpush1.msra.mxu0 %v21
    %364 = vmatprep.subr.mxu0 0.0
    %365 = vmatpush1.msra.mxu0 %v20
    %366 = vmatprep.subr.mxu0 0.0
    %367 = vmatpush2.msra.mxu0 0.0
    %368 = vmatprep.subr.mxu0 0.0
    %369 = vmatpush2.msra.mxu0 0.0
    %370 = vmatprep.subr.mxu0 0.0
    %371 = vmatpush2.msra.mxu0 0.0
    %372 = vmatprep.subr.mxu0 0.0
    %373 = vmatpush2.msra.mxu0 0.0
    %374 = vmatprep.subr.mxu0 0.0
    %375 = vmatpush2.msra.mxu0 0.0
    %376 = vmatprep.subr.mxu0 0.0
    %377 = vmatpush2.msra.mxu0 0.0
    %378 = vmatprep.subr.mxu0 0.0
    %379 = vmatpush2.msra.mxu0 0.0
    %380 = vmatprep.subr.mxu0 0.0
    %381 = vmatpush2.msra.mxu0 0.0
    %382 = vmatprep.subr.mxu0 0.0
    %383 = vmatpush2.msra.mxu0 0.0
    %384 = vmatprep.subr.mxu0 0.0
    %385 = vmatpush2.msra.mxu0 0.0
    %386 = vmatprep.subr.mxu0 0.0
    %387 = vmatpush2.msra.mxu0 0.0
    %388 = vmatprep.subr.mxu0 0.0
    %389 = vmatpush2.msra.mxu0 0.0
    %390 = vmatprep.subr.mxu0 0.0
    %391 = vmatpush2.msra.mxu0 0.0
    %392 = vmatprep.subr.mxu0 0.0
    %393 = vmatpush2.msra.mxu0 0.0
    %394 = vmatprep.subr.mxu0 0.0
    %395 = vmatpush2.msra.mxu0 0.0
    %396 = vmatprep.subr.mxu0 0.0
    %397 = vmatpush2.msra.mxu0 0.0
    %398 = vmatprep.mubr.f32.mxu0 0.0
    %399 = vmatmul.mubr.f32.gmra.mxu0 %v332
    %v400 = vpop.f32.mrf.mxu0
    %v401 = vadd.f32 0.0, %v400
    %v402 = vpop.f32.mrf.mxu0
    %403 = vdwg.mxu0
    %v404 = vadd.f32 %v330, %v401
    %v405 = vxor.u32 %v404, 2147483648
    %v406 = vmul.f32 %v405, 1.442695
    %v407 = vpow.pop %v406
    %v408 = vadd.f32 %v407, 1.0
    %v409 = vrcp.pop %v408
    %v410 = vmul.f32 1.0, %v409
    %v411 = vtanh.pop %v404
    %413 = vrot.lane.b32.xlu0 %v299, 32
    %v414 = vpop.permute.xlu0 %413
    %v416 = vmul.f32 %v410, %v414
    %418 = vrot.lane.b32.xlu0 %v411, 64
    %v419 = vpop.permute.xlu0 %418
    %v421 = vmul.f32 %v410, %v419
    %423 = vrot.lane.b32.xlu0 %v421, 32
    %v424 = vpop.permute.xlu0 %423
    %v426 = vadd.f32 %v416, %v424
    %v427 = vtanh.pop %v426
    %429 = vrot.lane.b32.xlu0 %v427, 64
    %v430 = vpop.permute.xlu0 %429
    %v432 = vmul.f32 %v410, %v430
    %v433 = vsel %vm29, 2, 5
    %vm434 = vcmp.gt.s32.totalorder %v142, %v433
    %436 = vrot.lane.b32.xlu0 %v432, 32
    %v437 = vpop.permute.xlu0 %436
    %v439 = vsel %vm434, %v437, %v294
    %441 = vrot.lane.b32.xlu0 %v426, 96
    %v442 = vpop.permute.xlu0 %441
    %v444 = vsel %vm434, %v442, %v299
    %vm445 = vcmp.gt.s32.totalorder %v24, 2
    %vm446 = vcmp.gt.s32.totalorder %v24, 5
    %v447 = vsel %vm445, 1, 0
    %448 = vset.pattern.permute.xlu0 0
    %449 = vperm.xlu0 %448, %v447
    %v450 = vpop.permute.xlu0 %449
    %vm451 = vcmp.eq.s32.totalorder %v450, 1
    %v452 = vsel %vm451, %v432, 0.0
    %454 = vrot.lane.b32.xlu0 %v452, 32
    %v455 = vpop.permute.xlu0 %454
    %s457 = scalar_lea.vmem %s4, 8
    %458 = vst.msk [vmem:[%s457] sm:$0xf] %vm166, %v455
    %v459 = vsel %vm446, 1, 0
    %460 = vset.pattern.permute.xlu0 0
    %461 = vperm.xlu0 %460, %v459
    %v462 = vpop.permute.xlu0 %461
    %vm463 = vcmp.eq.s32.totalorder %v462, 1
    %v464 = vsel %vm463, %v432, 0.0
    %466 = vrot.lane.b32.xlu0 %v464, 32
    %v467 = vpop.permute.xlu0 %466
    %s469 = scalar_lea.vmem %s4, 20
    %470 = vst.msk [vmem:[%s469] sm:$0xf] %vm179, %v467
    %s471 = scalar_lea.vmem %s0, 12
    %v472 = vld [vmem:[%s471] sm:$0xf]
    %s473 = scalar_lea.vmem %s0, 16
    %v474 = vld [vmem:[%s473] sm:$0xf]
    %v475 = vsel %vm38, %v472, %v474
    %v477 = vsel %vm40, %v439, 0
    %479 = vmatprep.subr.mxu0 0.0
    %480 = vmatpush1.msra.mxu0 0.0
    %481 = vmatprep.subr.mxu0 0.0
    %482 = vmatpush1.msra.mxu0 0.0
    %483 = vmatprep.subr.mxu0 0.0
    %484 = vmatpush1.msra.mxu0 0.0
    %485 = vmatprep.subr.mxu0 0.0
    %486 = vmatpush1.msra.mxu0 0.0
    %487 = vmatprep.subr.mxu0 0.0
    %488 = vmatpush1.msra.mxu0 0.0
    %489 = vmatprep.subr.mxu0 0.0
    %490 = vmatpush1.msra.mxu0 0.0
    %491 = vmatprep.subr.mxu0 0.0
    %492 = vmatpush1.msra.mxu0 0.0
    %493 = vmatprep.subr.mxu0 0.0
    %494 = vmatpush1.msra.mxu0 0.0
    %495 = vmatprep.subr.mxu0 0.0
    %496 = vmatpush1.msra.mxu0 0.0
    %497 = vmatprep.subr.mxu0 0.0
    %498 = vmatpush1.msra.mxu0 0.0
    %499 = vmatprep.subr.mxu0 0.0
    %500 = vmatpush1.msra.mxu0 0.0
    %501 = vmatprep.subr.mxu0 0.0
    %502 = vmatpush1.msra.mxu0 0.0
    %503 = vmatprep.subr.mxu0 0.0
    %504 = vmatpush1.msra.mxu0 %v23
    %505 = vmatprep.subr.mxu0 0.0
    %506 = vmatpush1.msra.mxu0 %v22
    %507 = vmatprep.subr.mxu0 0.0
    %508 = vmatpush1.msra.mxu0 %v21
    %509 = vmatprep.subr.mxu0 0.0
    %510 = vmatpush1.msra.mxu0 %v20
    %511 = vmatprep.subr.mxu0 0.0
    %512 = vmatpush2.msra.mxu0 0.0
    %513 = vmatprep.subr.mxu0 0.0
    %514 = vmatpush2.msra.mxu0 0.0
    %515 = vmatprep.subr.mxu0 0.0
    %516 = vmatpush2.msra.mxu0 0.0
    %517 = vmatprep.subr.mxu0 0.0
    %518 = vmatpush2.msra.mxu0 0.0
    %519 = vmatprep.subr.mxu0 0.0
    %520 = vmatpush2.msra.mxu0 0.0
    %521 = vmatprep.subr.mxu0 0.0
    %522 = vmatpush2.msra.mxu0 0.0
    %523 = vmatprep.subr.mxu0 0.0
    %524 = vmatpush2.msra.mxu0 0.0
    %525 = vmatprep.subr.mxu0 0.0
    %526 = vmatpush2.msra.mxu0 0.0
    %527 = vmatprep.subr.mxu0 0.0
    %528 = vmatpush2.msra.mxu0 0.0
    %529 = vmatprep.subr.mxu0 0.0
    %530 = vmatpush2.msra.mxu0 0.0
    %531 = vmatprep.subr.mxu0 0.0
    %532 = vmatpush2.msra.mxu0 0.0
    %533 = vmatprep.subr.mxu0 0.0
    %534 = vmatpush2.msra.mxu0 0.0
    %535 = vmatprep.subr.mxu0 0.0
    %536 = vmatpush2.msra.mxu0 0.0
    %537 = vmatprep.subr.mxu0 0.0
    %538 = vmatpush2.msra.mxu0 0.0
    %539 = vmatprep.subr.mxu0 0.0
    %540 = vmatpush2.msra.mxu0 0.0
    %541 = vmatprep.subr.mxu0 0.0
    %542 = vmatpush2.msra.mxu0 0.0
    %543 = vmatprep.mubr.f32.mxu0 0.0
    %544 = vmatmul.mubr.f32.gmra.mxu0 %v477
    %v545 = vpop.f32.mrf.mxu0
    %v546 = vadd.f32 0.0, %v545
    %v547 = vpop.f32.mrf.mxu0
    %548 = vdwg.mxu0
    %v549 = vadd.f32 %v475, %v546
    %v550 = vxor.u32 %v549, 2147483648
    %v551 = vmul.f32 %v550, 1.442695
    %v552 = vpow.pop %v551
    %v553 = vadd.f32 %v552, 1.0
    %v554 = vrcp.pop %v553
    %v555 = vmul.f32 1.0, %v554
    %v556 = vtanh.pop %v549
    %558 = vrot.lane.b32.xlu0 %v444, 32
    %v559 = vpop.permute.xlu0 %558
    %v561 = vmul.f32 %v555, %v559
    %563 = vrot.lane.b32.xlu0 %v556, 64
    %v564 = vpop.permute.xlu0 %563
    %v566 = vmul.f32 %v555, %v564
    %568 = vrot.lane.b32.xlu0 %v566, 32
    %v569 = vpop.permute.xlu0 %568
    %v571 = vadd.f32 %v561, %v569
    %v572 = vtanh.pop %v571
    %574 = vrot.lane.b32.xlu0 %v572, 64
    %v575 = vpop.permute.xlu0 %574
    %v577 = vmul.f32 %v555, %v575
    %v578 = vsel %vm29, 3, 4
    %vm579 = vcmp.gt.s32.totalorder %v142, %v578
    %581 = vrot.lane.b32.xlu0 %v577, 32
    %v582 = vpop.permute.xlu0 %581
    %v584 = vsel %vm579, %v582, %v439
    %586 = vrot.lane.b32.xlu0 %v571, 96
    %v587 = vpop.permute.xlu0 %586
    %v589 = vsel %vm579, %v587, %v444
    %vm590 = vcmp.gt.s32.totalorder %v24, 3
    %vm591 = vcmp.gt.s32.totalorder %v24, 4
    %v592 = vsel %vm590, 1, 0
    %593 = vset.pattern.permute.xlu0 0
    %594 = vperm.xlu0 %593, %v592
    %v595 = vpop.permute.xlu0 %594
    %vm596 = vcmp.eq.s32.totalorder %v595, 1
    %v597 = vsel %vm596, %v577, 0.0
    %599 = vrot.lane.b32.xlu0 %v597, 32
    %v600 = vpop.permute.xlu0 %599
    %s602 = scalar_lea.vmem %s4, 12
    %603 = vst.msk [vmem:[%s602] sm:$0xf] %vm166, %v600
    %v604 = vsel %vm591, 1, 0
    %605 = vset.pattern.permute.xlu0 0
    %606 = vperm.xlu0 %605, %v604
    %v607 = vpop.permute.xlu0 %606
    %vm608 = vcmp.eq.s32.totalorder %v607, 1
    %v609 = vsel %vm608, %v577, 0.0
    %611 = vrot.lane.b32.xlu0 %v609, 32
    %v612 = vpop.permute.xlu0 %611
    %s614 = scalar_lea.vmem %s4, 16
    %615 = vst.msk [vmem:[%s614] sm:$0xf] %vm179, %v612
    %v616 = vld [vmem:[%s473] sm:$0xf]
    %v617 = vld [vmem:[%s471] sm:$0xf]
    %v618 = vsel %vm38, %v616, %v617
    %v620 = vsel %vm40, %v584, 0
    %622 = vmatprep.subr.mxu0 0.0
    %623 = vmatpush1.msra.mxu0 0.0
    %624 = vmatprep.subr.mxu0 0.0
    %625 = vmatpush1.msra.mxu0 0.0
    %626 = vmatprep.subr.mxu0 0.0
    %627 = vmatpush1.msra.mxu0 0.0
    %628 = vmatprep.subr.mxu0 0.0
    %629 = vmatpush1.msra.mxu0 0.0
    %630 = vmatprep.subr.mxu0 0.0
    %631 = vmatpush1.msra.mxu0 0.0
    %632 = vmatprep.subr.mxu0 0.0
    %633 = vmatpush1.msra.mxu0 0.0
    %634 = vmatprep.subr.mxu0 0.0
    %635 = vmatpush1.msra.mxu0 0.0
    %636 = vmatprep.subr.mxu0 0.0
    %637 = vmatpush1.msra.mxu0 0.0
    %638 = vmatprep.subr.mxu0 0.0
    %639 = vmatpush1.msra.mxu0 0.0
    %640 = vmatprep.subr.mxu0 0.0
    %641 = vmatpush1.msra.mxu0 0.0
    %642 = vmatprep.subr.mxu0 0.0
    %643 = vmatpush1.msra.mxu0 0.0
    %644 = vmatprep.subr.mxu0 0.0
    %645 = vmatpush1.msra.mxu0 0.0
    %646 = vmatprep.subr.mxu0 0.0
    %647 = vmatpush1.msra.mxu0 %v23
    %648 = vmatprep.subr.mxu0 0.0
    %649 = vmatpush1.msra.mxu0 %v22
    %650 = vmatprep.subr.mxu0 0.0
    %651 = vmatpush1.msra.mxu0 %v21
    %652 = vmatprep.subr.mxu0 0.0
    %653 = vmatpush1.msra.mxu0 %v20
    %654 = vmatprep.subr.mxu0 0.0
    %655 = vmatpush2.msra.mxu0 0.0
    %656 = vmatprep.subr.mxu0 0.0
    %657 = vmatpush2.msra.mxu0 0.0
    %658 = vmatprep.subr.mxu0 0.0
    %659 = vmatpush2.msra.mxu0 0.0
    %660 = vmatprep.subr.mxu0 0.0
    %661 = vmatpush2.msra.mxu0 0.0
    %662 = vmatprep.subr.mxu0 0.0
    %663 = vmatpush2.msra.mxu0 0.0
    %664 = vmatprep.subr.mxu0 0.0
    %665 = vmatpush2.msra.mxu0 0.0
    %666 = vmatprep.subr.mxu0 0.0
    %667 = vmatpush2.msra.mxu0 0.0
    %668 = vmatprep.subr.mxu0 0.0
    %669 = vmatpush2.msra.mxu0 0.0
    %670 = vmatprep.subr.mxu0 0.0
    %671 = vmatpush2.msra.mxu0 0.0
    %672 = vmatprep.subr.mxu0 0.0
    %673 = vmatpush2.msra.mxu0 0.0
    %674 = vmatprep.subr.mxu0 0.0
    %675 = vmatpush2.msra.mxu0 0.0
    %676 = vmatprep.subr.mxu0 0.0
    %677 = vmatpush2.msra.mxu0 0.0
    %678 = vmatprep.subr.mxu0 0.0
    %679 = vmatpush2.msra.mxu0 0.0
    %680 = vmatprep.subr.mxu0 0.0
    %681 = vmatpush2.msra.mxu0 0.0
    %682 = vmatprep.subr.mxu0 0.0
    %683 = vmatpush2.msra.mxu0 0.0
    %684 = vmatprep.subr.mxu0 0.0
    %685 = vmatpush2.msra.mxu0 0.0
    %686 = vmatprep.mubr.f32.mxu0 0.0
    %687 = vmatmul.mubr.f32.gmra.mxu0 %v620
    %v688 = vpop.f32.mrf.mxu0
    %v689 = vadd.f32 0.0, %v688
    %v690 = vpop.f32.mrf.mxu0
    %691 = vdwg.mxu0
    %v692 = vadd.f32 %v618, %v689
    %v693 = vxor.u32 %v692, 2147483648
    %v694 = vmul.f32 %v693, 1.442695
    %v695 = vpow.pop %v694
    %v696 = vadd.f32 %v695, 1.0
    %v697 = vrcp.pop %v696
    %v698 = vmul.f32 1.0, %v697
    %v699 = vtanh.pop %v692
    %701 = vrot.lane.b32.xlu0 %v589, 32
    %v702 = vpop.permute.xlu0 %701
    %v704 = vmul.f32 %v698, %v702
    %706 = vrot.lane.b32.xlu0 %v699, 64
    %v707 = vpop.permute.xlu0 %706
    %v709 = vmul.f32 %v698, %v707
    %711 = vrot.lane.b32.xlu0 %v709, 32
    %v712 = vpop.permute.xlu0 %711
    %v714 = vadd.f32 %v704, %v712
    %v715 = vtanh.pop %v714
    %717 = vrot.lane.b32.xlu0 %v715, 64
    %v718 = vpop.permute.xlu0 %717
    %v720 = vmul.f32 %v698, %v718
    %v721 = vsel %vm29, 4, 3
    %vm722 = vcmp.gt.s32.totalorder %v142, %v721
    %724 = vrot.lane.b32.xlu0 %v720, 32
    %v725 = vpop.permute.xlu0 %724
    %v727 = vsel %vm722, %v725, %v584
    %729 = vrot.lane.b32.xlu0 %v714, 96
    %v730 = vpop.permute.xlu0 %729
    %v732 = vsel %vm722, %v730, %v589
    %v733 = vsel %vm608, %v720, 0.0
    %735 = vrot.lane.b32.xlu0 %v733, 32
    %v736 = vpop.permute.xlu0 %735
    %738 = vst.msk [vmem:[%s614] sm:$0xf] %vm166, %v736
    %v739 = vsel %vm596, %v720, 0.0
    %741 = vrot.lane.b32.xlu0 %v739, 32
    %v742 = vpop.permute.xlu0 %741
    %744 = vst.msk [vmem:[%s602] sm:$0xf] %vm179, %v742
    %v745 = vld [vmem:[%s328] sm:$0xf]
    %v746 = vld [vmem:[%s326] sm:$0xf]
    %v747 = vsel %vm38, %v745, %v746
    %v749 = vsel %vm40, %v727, 0
    %751 = vmatprep.subr.mxu0 0.0
    %752 = vmatpush1.msra.mxu0 0.0
    %753 = vmatprep.subr.mxu0 0.0
    %754 = vmatpush1.msra.mxu0 0.0
    %755 = vmatprep.subr.mxu0 0.0
    %756 = vmatpush1.msra.mxu0 0.0
    %757 = vmatprep.subr.mxu0 0.0
    %758 = vmatpush1.msra.mxu0 0.0
    %759 = vmatprep.subr.mxu0 0.0
    %760 = vmatpush1.msra.mxu0 0.0
    %761 = vmatprep.subr.mxu0 0.0
    %762 = vmatpush1.msra.mxu0 0.0
    %763 = vmatprep.subr.mxu0 0.0
    %764 = vmatpush1.msra.mxu0 0.0
    %765 = vmatprep.subr.mxu0 0.0
    %766 = vmatpush1.msra.mxu0 0.0
    %767 = vmatprep.subr.mxu0 0.0
    %768 = vmatpush1.msra.mxu0 0.0
    %769 = vmatprep.subr.mxu0 0.0
    %770 = vmatpush1.msra.mxu0 0.0
    %771 = vmatprep.subr.mxu0 0.0
    %772 = vmatpush1.msra.mxu0 0.0
    %773 = vmatprep.subr.mxu0 0.0
    %774 = vmatpush1.msra.mxu0 0.0
    %775 = vmatprep.subr.mxu0 0.0
    %776 = vmatpush1.msra.mxu0 %v23
    %777 = vmatprep.subr.mxu0 0.0
    %778 = vmatpush1.msra.mxu0 %v22
    %779 = vmatprep.subr.mxu0 0.0
    %780 = vmatpush1.msra.mxu0 %v21
    %781 = vmatprep.subr.mxu0 0.0
    %782 = vmatpush1.msra.mxu0 %v20
    %783 = vmatprep.subr.mxu0 0.0
    %784 = vmatpush2.msra.mxu0 0.0
    %785 = vmatprep.subr.mxu0 0.0
    %786 = vmatpush2.msra.mxu0 0.0
    %787 = vmatprep.subr.mxu0 0.0
    %788 = vmatpush2.msra.mxu0 0.0
    %789 = vmatprep.subr.mxu0 0.0
    %790 = vmatpush2.msra.mxu0 0.0
    %791 = vmatprep.subr.mxu0 0.0
    %792 = vmatpush2.msra.mxu0 0.0
    %793 = vmatprep.subr.mxu0 0.0
    %794 = vmatpush2.msra.mxu0 0.0
    %795 = vmatprep.subr.mxu0 0.0
    %796 = vmatpush2.msra.mxu0 0.0
    %797 = vmatprep.subr.mxu0 0.0
    %798 = vmatpush2.msra.mxu0 0.0
    %799 = vmatprep.subr.mxu0 0.0
    %800 = vmatpush2.msra.mxu0 0.0
    %801 = vmatprep.subr.mxu0 0.0
    %802 = vmatpush2.msra.mxu0 0.0
    %803 = vmatprep.subr.mxu0 0.0
    %804 = vmatpush2.msra.mxu0 0.0
    %805 = vmatprep.subr.mxu0 0.0
    %806 = vmatpush2.msra.mxu0 0.0
    %807 = vmatprep.subr.mxu0 0.0
    %808 = vmatpush2.msra.mxu0 0.0
    %809 = vmatprep.subr.mxu0 0.0
    %810 = vmatpush2.msra.mxu0 0.0
    %811 = vmatprep.subr.mxu0 0.0
    %812 = vmatpush2.msra.mxu0 0.0
    %813 = vmatprep.subr.mxu0 0.0
    %814 = vmatpush2.msra.mxu0 0.0
    %815 = vmatprep.mubr.f32.mxu0 0.0
    %816 = vmatmul.mubr.f32.gmra.mxu0 %v749
    %v817 = vpop.f32.mrf.mxu0
    %v818 = vadd.f32 0.0, %v817
    %v819 = vpop.f32.mrf.mxu0
    %820 = vdwg.mxu0
    %v821 = vadd.f32 %v747, %v818
    %v822 = vxor.u32 %v821, 2147483648
    %v823 = vmul.f32 %v822, 1.442695
    %v824 = vpow.pop %v823
    %v825 = vadd.f32 %v824, 1.0
    %v826 = vrcp.pop %v825
    %v827 = vmul.f32 1.0, %v826
    %v828 = vtanh.pop %v821
    %830 = vrot.lane.b32.xlu0 %v732, 32
    %v831 = vpop.permute.xlu0 %830
    %v833 = vmul.f32 %v827, %v831
    %835 = vrot.lane.b32.xlu0 %v828, 64
    %v836 = vpop.permute.xlu0 %835
    %v838 = vmul.f32 %v827, %v836
    %840 = vrot.lane.b32.xlu0 %v838, 32
    %v841 = vpop.permute.xlu0 %840
    %v843 = vadd.f32 %v833, %v841
    %v844 = vtanh.pop %v843
    %846 = vrot.lane.b32.xlu0 %v844, 64
    %v847 = vpop.permute.xlu0 %846
    %v849 = vmul.f32 %v827, %v847
    %v850 = vsel %vm29, 5, 2
    %vm851 = vcmp.gt.s32.totalorder %v142, %v850
    %853 = vrot.lane.b32.xlu0 %v849, 32
    %v854 = vpop.permute.xlu0 %853
    %v856 = vsel %vm851, %v854, %v727
    %858 = vrot.lane.b32.xlu0 %v843, 96
    %v859 = vpop.permute.xlu0 %858
    %v861 = vsel %vm851, %v859, %v732
    %v862 = vsel %vm463, %v849, 0.0
    %864 = vrot.lane.b32.xlu0 %v862, 32
    %v865 = vpop.permute.xlu0 %864
    %867 = vst.msk [vmem:[%s469] sm:$0xf] %vm166, %v865
    %v868 = vsel %vm451, %v849, 0.0
    %870 = vrot.lane.b32.xlu0 %v868, 32
    %v871 = vpop.permute.xlu0 %870
    %873 = vst.msk [vmem:[%s457] sm:$0xf] %vm179, %v871
    %v874 = vld [vmem:[%s183] sm:$0xf]
    %v875 = vld [vmem:[%s181] sm:$0xf]
    %v876 = vsel %vm38, %v874, %v875
    %v878 = vsel %vm40, %v856, 0
    %880 = vmatprep.subr.mxu0 0.0
    %881 = vmatpush1.msra.mxu0 0.0
    %882 = vmatprep.subr.mxu0 0.0
    %883 = vmatpush1.msra.mxu0 0.0
    %884 = vmatprep.subr.mxu0 0.0
    %885 = vmatpush1.msra.mxu0 0.0
    %886 = vmatprep.subr.mxu0 0.0
    %887 = vmatpush1.msra.mxu0 0.0
    %888 = vmatprep.subr.mxu0 0.0
    %889 = vmatpush1.msra.mxu0 0.0
    %890 = vmatprep.subr.mxu0 0.0
    %891 = vmatpush1.msra.mxu0 0.0
    %892 = vmatprep.subr.mxu0 0.0
    %893 = vmatpush1.msra.mxu0 0.0
    %894 = vmatprep.subr.mxu0 0.0
    %895 = vmatpush1.msra.mxu0 0.0
    %896 = vmatprep.subr.mxu0 0.0
    %897 = vmatpush1.msra.mxu0 0.0
    %898 = vmatprep.subr.mxu0 0.0
    %899 = vmatpush1.msra.mxu0 0.0
    %900 = vmatprep.subr.mxu0 0.0
    %901 = vmatpush1.msra.mxu0 0.0
    %902 = vmatprep.subr.mxu0 0.0
    %903 = vmatpush1.msra.mxu0 0.0
    %904 = vmatprep.subr.mxu0 0.0
    %905 = vmatpush1.msra.mxu0 %v23
    %906 = vmatprep.subr.mxu0 0.0
    %907 = vmatpush1.msra.mxu0 %v22
    %908 = vmatprep.subr.mxu0 0.0
    %909 = vmatpush1.msra.mxu0 %v21
    %910 = vmatprep.subr.mxu0 0.0
    %911 = vmatpush1.msra.mxu0 %v20
    %912 = vmatprep.subr.mxu0 0.0
    %913 = vmatpush2.msra.mxu0 0.0
    %914 = vmatprep.subr.mxu0 0.0
    %915 = vmatpush2.msra.mxu0 0.0
    %916 = vmatprep.subr.mxu0 0.0
    %917 = vmatpush2.msra.mxu0 0.0
    %918 = vmatprep.subr.mxu0 0.0
    %919 = vmatpush2.msra.mxu0 0.0
    %920 = vmatprep.subr.mxu0 0.0
    %921 = vmatpush2.msra.mxu0 0.0
    %922 = vmatprep.subr.mxu0 0.0
    %923 = vmatpush2.msra.mxu0 0.0
    %924 = vmatprep.subr.mxu0 0.0
    %925 = vmatpush2.msra.mxu0 0.0
    %926 = vmatprep.subr.mxu0 0.0
    %927 = vmatpush2.msra.mxu0 0.0
    %928 = vmatprep.subr.mxu0 0.0
    %929 = vmatpush2.msra.mxu0 0.0
    %930 = vmatprep.subr.mxu0 0.0
    %931 = vmatpush2.msra.mxu0 0.0
    %932 = vmatprep.subr.mxu0 0.0
    %933 = vmatpush2.msra.mxu0 0.0
    %934 = vmatprep.subr.mxu0 0.0
    %935 = vmatpush2.msra.mxu0 0.0
    %936 = vmatprep.subr.mxu0 0.0
    %937 = vmatpush2.msra.mxu0 0.0
    %938 = vmatprep.subr.mxu0 0.0
    %939 = vmatpush2.msra.mxu0 0.0
    %940 = vmatprep.subr.mxu0 0.0
    %941 = vmatpush2.msra.mxu0 0.0
    %942 = vmatprep.subr.mxu0 0.0
    %943 = vmatpush2.msra.mxu0 0.0
    %944 = vmatprep.mubr.f32.mxu0 0.0
    %945 = vmatmul.mubr.f32.gmra.mxu0 %v878
    %v946 = vpop.f32.mrf.mxu0
    %v947 = vadd.f32 0.0, %v946
    %v948 = vpop.f32.mrf.mxu0
    %949 = vdwg.mxu0
    %v950 = vadd.f32 %v876, %v947
    %v951 = vxor.u32 %v950, 2147483648
    %v952 = vmul.f32 %v951, 1.442695
    %v953 = vpow.pop %v952
    %v954 = vadd.f32 %v953, 1.0
    %v955 = vrcp.pop %v954
    %v956 = vmul.f32 1.0, %v955
    %v957 = vtanh.pop %v950
    %959 = vrot.lane.b32.xlu0 %v861, 32
    %v960 = vpop.permute.xlu0 %959
    %v962 = vmul.f32 %v956, %v960
    %964 = vrot.lane.b32.xlu0 %v957, 64
    %v965 = vpop.permute.xlu0 %964
    %v967 = vmul.f32 %v956, %v965
    %969 = vrot.lane.b32.xlu0 %v967, 32
    %v970 = vpop.permute.xlu0 %969
    %v972 = vadd.f32 %v962, %v970
    %v973 = vtanh.pop %v972
    %975 = vrot.lane.b32.xlu0 %v973, 64
    %v976 = vpop.permute.xlu0 %975
    %v978 = vmul.f32 %v956, %v976
    %v979 = vsel %vm29, 6, 1
    %vm980 = vcmp.gt.s32.totalorder %v142, %v979
    %982 = vrot.lane.b32.xlu0 %v978, 32
    %v983 = vpop.permute.xlu0 %982
    %v985 = vsel %vm980, %v983, %v856
    %987 = vrot.lane.b32.xlu0 %v972, 96
    %v988 = vpop.permute.xlu0 %987
    %v990 = vsel %vm980, %v988, %v861
    %v991 = vsel %vm318, %v978, 0.0
    %993 = vrot.lane.b32.xlu0 %v991, 32
    %v994 = vpop.permute.xlu0 %993
    %996 = vst.msk [vmem:[%s324] sm:$0xf] %vm166, %v994
    %v997 = vsel %vm306, %v978, 0.0
    %999 = vrot.lane.b32.xlu0 %v997, 32
    %v1000 = vpop.permute.xlu0 %999
    %1002 = vst.msk [vmem:[%s312] sm:$0xf] %vm179, %v1000
    %v1003 = vld [vmem:[%s31] sm:$0xf]
    %v1004 = vld [vmem:[%s0] sm:$0xf]
    %v1005 = vsel %vm38, %v1003, %v1004
    %v1007 = vsel %vm40, %v985, 0
    %1009 = vmatprep.subr.mxu0 0.0
    %1010 = vmatpush1.msra.mxu0 0.0
    %1011 = vmatprep.subr.mxu0 0.0
    %1012 = vmatpush1.msra.mxu0 0.0
    %1013 = vmatprep.subr.mxu0 0.0
    %1014 = vmatpush1.msra.mxu0 0.0
    %1015 = vmatprep.subr.mxu0 0.0
    %1016 = vmatpush1.msra.mxu0 0.0
    %1017 = vmatprep.subr.mxu0 0.0
    %1018 = vmatpush1.msra.mxu0 0.0
    %1019 = vmatprep.subr.mxu0 0.0
    %1020 = vmatpush1.msra.mxu0 0.0
    %1021 = vmatprep.subr.mxu0 0.0
    %1022 = vmatpush1.msra.mxu0 0.0
    %1023 = vmatprep.subr.mxu0 0.0
    %1024 = vmatpush1.msra.mxu0 0.0
    %1025 = vmatprep.subr.mxu0 0.0
    %1026 = vmatpush1.msra.mxu0 0.0
    %1027 = vmatprep.subr.mxu0 0.0
    %1028 = vmatpush1.msra.mxu0 0.0
    %1029 = vmatprep.subr.mxu0 0.0
    %1030 = vmatpush1.msra.mxu0 0.0
    %1031 = vmatprep.subr.mxu0 0.0
    %1032 = vmatpush1.msra.mxu0 0.0
    %1033 = vmatprep.subr.mxu0 0.0
    %1034 = vmatpush1.msra.mxu0 %v23
    %1035 = vmatprep.subr.mxu0 0.0
    %1036 = vmatpush1.msra.mxu0 %v22
    %1037 = vmatprep.subr.mxu0 0.0
    %1038 = vmatpush1.msra.mxu0 %v21
    %1039 = vmatprep.subr.mxu0 0.0
    %1040 = vmatpush1.msra.mxu0 %v20
    %1041 = vmatprep.subr.mxu0 0.0
    %1042 = vmatpush2.msra.mxu0 0.0
    %1043 = vmatprep.subr.mxu0 0.0
    %1044 = vmatpush2.msra.mxu0 0.0
    %1045 = vmatprep.subr.mxu0 0.0
    %1046 = vmatpush2.msra.mxu0 0.0
    %1047 = vmatprep.subr.mxu0 0.0
    %1048 = vmatpush2.msra.mxu0 0.0
    %1049 = vmatprep.subr.mxu0 0.0
    %1050 = vmatpush2.msra.mxu0 0.0
    %1051 = vmatprep.subr.mxu0 0.0
    %1052 = vmatpush2.msra.mxu0 0.0
    %1053 = vmatprep.subr.mxu0 0.0
    %1054 = vmatpush2.msra.mxu0 0.0
    %1055 = vmatprep.subr.mxu0 0.0
    %1056 = vmatpush2.msra.mxu0 0.0
    %1057 = vmatprep.subr.mxu0 0.0
    %1058 = vmatpush2.msra.mxu0 0.0
    %1059 = vmatprep.subr.mxu0 0.0
    %1060 = vmatpush2.msra.mxu0 0.0
    %1061 = vmatprep.subr.mxu0 0.0
    %1062 = vmatpush2.msra.mxu0 0.0
    %1063 = vmatprep.subr.mxu0 0.0
    %1064 = vmatpush2.msra.mxu0 0.0
    %1065 = vmatprep.subr.mxu0 0.0
    %1066 = vmatpush2.msra.mxu0 0.0
    %1067 = vmatprep.subr.mxu0 0.0
    %1068 = vmatpush2.msra.mxu0 0.0
    %1069 = vmatprep.subr.mxu0 0.0
    %1070 = vmatpush2.msra.mxu0 0.0
    %1071 = vmatprep.subr.mxu0 0.0
    %1072 = vmatpush2.msra.mxu0 0.0
    %1073 = vmatprep.mubr.f32.mxu0 0.0
    %1074 = vmatmul.mubr.f32.gmra.mxu0 %v1007
    %v1075 = vpop.f32.mrf.mxu0
    %v1076 = vadd.f32 0.0, %v1075
    %v1077 = vpop.f32.mrf.mxu0
    %1078 = vdwg.mxu0
    %v1079 = vadd.f32 %v1005, %v1076
    %v1080 = vxor.u32 %v1079, 2147483648
    %v1081 = vmul.f32 %v1080, 1.442695
    %v1082 = vpow.pop %v1081
    %v1083 = vadd.f32 %v1082, 1.0
    %v1084 = vrcp.pop %v1083
    %v1085 = vmul.f32 1.0, %v1084
    %v1086 = vtanh.pop %v1079
    %1088 = vrot.lane.b32.xlu0 %v990, 32
    %v1089 = vpop.permute.xlu0 %1088
    %v1091 = vmul.f32 %v1085, %v1089
    %1093 = vrot.lane.b32.xlu0 %v1086, 64
    %v1094 = vpop.permute.xlu0 %1093
    %v1096 = vmul.f32 %v1085, %v1094
    %1098 = vrot.lane.b32.xlu0 %v1096, 32
    %v1099 = vpop.permute.xlu0 %1098
    %v1101 = vadd.f32 %v1091, %v1099
    %v1102 = vtanh.pop %v1101
    %1104 = vrot.lane.b32.xlu0 %v1102, 64
    %v1105 = vpop.permute.xlu0 %1104
    %v1107 = vmul.f32 %v1085, %v1105
    %v1108 = vsel %vm29, 7, 0
    %vm1109 = vcmp.gt.s32.totalorder %v142, %v1108
    %1111 = vrot.lane.b32.xlu0 %v1107, 32
    %v1112 = vpop.permute.xlu0 %1111
    %v1114 = vsel %vm1109, %v1112, %v985
    %v1115 = vsel %vm172, %v1107, 0.0
    %1117 = vrot.lane.b32.xlu0 %v1115, 32
    %v1118 = vpop.permute.xlu0 %1117
    %1120 = vst.msk [vmem:[%s178] sm:$0xf] %vm166, %v1118
    %v1121 = vsel %vm160, %v1107, 0.0
    %1123 = vrot.lane.b32.xlu0 %v1121, 32
    %v1124 = vpop.permute.xlu0 %1123
    %1126 = vst.msk [vmem:[%s4] sm:$0xf] %vm179, %v1124
    %vm1127 = vcmask 257024
    %1128 = vst.msk [vmem:[#allocation2] sm:$0xf] %vm1127, %v1114
    // Predicated region
    $region18: #{bilstm_forward.1} parent=1 // pred_check
      _
    $region19: #{bilstm_forward.1} parent=1 // pred_check_branch
      %1130 = sbr.rel (0) target = $region21
    $region20: #{bilstm_forward.1} parent=1 // pred_region
      _
    $region21: #{bilstm_forward.1} parent=1 // pred_fallthru
      _
    // Predicated region
    $region22: #{bilstm_forward.1} parent=1 // pred_check
      _
    $region23: #{bilstm_forward.1} parent=1 // pred_check_branch
      %1132 = sbr.rel (0) target = $region25
    $region24: #{bilstm_forward.1} parent=1 // pred_region
      %s1134 = ssub.s32 64, 64
      %1135 = vsyncadd [#allocation3], %s1134
      %s1137 = sshll.u32 [#allocation2], 4
      %s1138 = int_to_ptr.vmem [resolvable:$true] %s1137
      %1140 = dma.vmem_to_hbm [thread:$0]  %s1138, 64, %s5, [#allocation3]
    $region25: #{bilstm_forward.1} parent=1 // pred_fallthru
      _
    // Predicated region
    $region26: #{bilstm_forward.1} parent=1 // pred_check
      _
    $region27: #{bilstm_forward.1} parent=1 // pred_check_branch
      %1142 = sbr.rel (0) target = $region29
    $region28: #{bilstm_forward.1} parent=1 // pred_region
      _
    $region29: #{bilstm_forward.1} parent=1 // pred_fallthru
      _
    // Predicated region
    $region30: #{bilstm_forward.1} parent=1 // pred_check
      _
    $region31: #{bilstm_forward.1} parent=1 // pred_check_branch
      %1144 = sbr.rel (0) target = $region33
    $region32: #{bilstm_forward.1} parent=1 // pred_region
      %1145 = dma.done [#allocation3], 64
    $region33: #{bilstm_forward.1} parent=1 // pred_fallthru
      _
    %1146 = vsyncpa [#allocation3], 1

</llo_original>
